<compile_context>
chip_gen: v7x
topology: tpu7x:2x2x1
jax: 0.10.0
libtpu: 0.0.40
codegen_flags: <defaults>
</compile_context>

<pallas_src>
import jax
import jax.numpy as jnp
from jax import lax
from jax.experimental import pallas as pl
from jax.experimental.pallas import tpu as pltpu

# Small, module-consistent shapes.
B, N, D_IN, H, D_OUT = 2, 64, 2, 32, 1
NUM_META_STEPS = 3
INIT_LR = 0.01
SSL_WEIGHT = 1e-3

_PREC = jax.lax.Precision.HIGHEST  # reference (host autodiff) only; kernel is pure VPU f32


def _make_kernel(b, n, d_in, h_dim, num_steps, lr, grad_scale, ssl_weight):
    """grad_scale = 2 / (B * N * D_out): dMSE/dpred for the full-meta-batch mean."""
    m = b * n

    # Trace-time (host Python float) constants:
    #   decay_j = 1 - 2*lr*ssl_weight/(1+j)  -- SGD step combined with the L2-SSL grad,
    #   dscale  = lr * grad_scale            -- lr folded once into dMSE/dpred so every
    #                                           reduced gradient arrives already lr-scaled.
    decays = [1.0 - 2.0 * lr * ssl_weight / (1.0 + j) for j in range(num_steps)]
    dscale = lr * grad_scale

    def kernel(x_ref, y_ref, w1_ref, b1_ref, w2_ref, b2_ref, out_ref, interm_ref):
        y = y_ref[...]                                     # [1, M]
        xr = [x_ref[d:d + 1, :] for d in range(d_in)]      # d_in x [1, M]

        # Fast params: shared init -> lane-expanded per meta-batch element.
        # (torch: param[None].repeat((meta_batch_size,) + ...); here every one of the
        #  M = B*N lanes carries its owning element's copy, which then diverges.)
        w1e = [jnp.broadcast_to(w1_ref[:, d:d + 1], (h_dim, m)) for d in range(d_in)]
        b1e = jnp.broadcast_to(b1_ref[...], (h_dim, m))
        w2e = jnp.broadcast_to(w2_ref[...], (h_dim, m))    # D_out == 1
        b2e = jnp.broadcast_to(b2_ref[...], (1, m))

        # 0/1 lane masks selecting each meta-batch element's N-lane segment (hoisted,
        # built once outside the unrolled step loop so JAX never re-broadcasts them).
        lane = lax.broadcasted_iota(jnp.int32, (1, m), 1)
        masks = [((lane >= e * n) & (lane < (e + 1) * n)).astype(jnp.float32)
                 for e in range(b)]

        def seg_sum(t):
            # Per-element lane reduction, broadcast back onto that element's lanes
            # (fast params / grads are independent per meta-batch element).
            out = jnp.zeros_like(t)
            for msk in masks:
                s = jnp.sum(t * msk, axis=1, keepdims=True)   # [R, 1] lane reduce (XLU)
                out = out + s * msk
            return out

        def fwd(w1e, b1e, w2e, b2e):
            z1 = b1e
            for d in range(d_in):                 # K = D_in = 2: broadcast VPU FMAs, no MXU
                z1 = z1 + w1e[d] * xr[d]
            hh = jnp.maximum(z1, 0.0)
            pred = jnp.sum(w2e * hh, axis=0, keepdims=True) + b2e  # D_out = 1: sublane reduce
            return z1, hh, pred

        # generate_params(): num_meta_steps inner SGD steps (fully unrolled; tiny).
        # TODO(synk): switch to lax.fori_loop(..., unroll=True) if num_meta_steps grows large.
        for j in range(num_steps):
            z1, hh, pred = fwd(w1e, b1e, w2e, b2e)
            interm_ref[j, :, :] = pred            # lane-dense 128-wide unmasked row store

            # Analytic grads of  task_loss (full-meta-batch MSE mean), lr pre-folded.
            dpred = dscale * (pred - y)                          # [1, M]  (= lr * dL/dpred)
            gw2 = seg_sum(hh * dpred)                            # [H, M]
            gb2 = seg_sum(dpred)                                 # [1, M]
            dh = w2e * dpred                                     # [H, M]
            dz1 = jnp.where(z1 > 0.0, dh, 0.0)                   # ReLU'
            gw1 = [seg_sum(dz1 * xr[d]) for d in range(d_in)]    # d_in x [H, M]
            gb1 = seg_sum(dz1)                                   # [H, M]

            # _update_step() with lr_type == 'static':
            #   p <- p - lr * (task_grad + 2*lam_j*p)  ==  decay_j * p - (lr*task_grad)
            dj = decays[j]
            w1e = [dj * w1e[d] - gw1[d] for d in range(d_in)]
            b1e = dj * b1e - gb1
            w2e = dj * w2e - gw2
            b2e = dj * b2e - gb2

        # forward(): hypo_module(sampled_coords, params=fast_params)
        _, _, pred = fwd(w1e, b1e, w2e, b2e)
        out_ref[...] = pred

    return kernel


def maml_ssl_forward(x, y, w1, b1, w2, b2,
                     num_meta_steps=NUM_META_STEPS, lr=INIT_LR, ssl_weight=SSL_WEIGHT):
    b_, n_, d_in = x.shape
    d_out = y.shape[-1]
    h_ = w1.shape[1]
    assert d_out == 1, "kernel layout assumes a scalar-output coordinate MLP"
    m = b_ * n_
    grad_scale = 2.0 / (b_ * n_ * d_out)

    # Lane-dense re-layout (host side): the contraction-free axis B*N goes on lanes.
    x_t = jnp.transpose(x, (2, 0, 1)).reshape(d_in, m)        # [D_in, M]
    y_t = jnp.transpose(y, (2, 0, 1)).reshape(d_out, m)       # [1, M]
    w1_t = jnp.transpose(w1)                                  # [H, D_in]
    b1_t = jnp.transpose(b1)                                  # [H, 1]
    # w2 is already an [H, 1] column; b2 is [1, 1].

    kernel = _make_kernel(b_, n_, d_in, h_, num_meta_steps, lr, grad_scale, ssl_weight)

    # Single kernel invocation (no grid): everything is far below the VMEM budget on
    # every TPU generation, so grid-step / multi-core overhead would dominate compute.
    model_out_t, intermed_t = pl.pallas_call(
        kernel,
        out_shape=(
            jax.ShapeDtypeStruct((1, m), jnp.float32),                   # model_out (lane-dense)
            jax.ShapeDtypeStruct((num_meta_steps, 1, m), jnp.float32),   # intermed  (lane-dense)
        ),
        in_specs=[pl.BlockSpec(memory_space=pltpu.MemorySpace.VMEM) for _ in range(6)],
        out_specs=(
            pl.BlockSpec(memory_space=pltpu.MemorySpace.VMEM),
            pl.BlockSpec(memory_space=pltpu.MemorySpace.VMEM),
        ),
    )(x_t, y_t, w1_t, b1_t, w2, b2)

    # TODO(synk): the torch host-side `float(loss.item()) > prev_loss` diagnostic print and
    # the non-'static' lr_type variants (global / per_step / per_parameter[_per_step]) are
    # not expressible in-kernel; only lr_type='static' is implemented.
    model_out = model_out_t.reshape(b_, n_, d_out)
    intermed_predictions = [intermed_t[j].reshape(b_, n_, d_out)
                            for j in range(num_meta_steps)]
    return {"model_out": model_out, "intermed_predictions": intermed_predictions}


def _ref_forward(x, y, w1, b1, w2, b2, num_meta_steps, lr, ssl_weight):
    """Pure-JAX reference mirroring MAMLWithSSL.forward (autodiff inner grads)."""
    b_ = x.shape[0]

    def hypo(params, xx):
        W1, B1, W2, B2 = params
        z1 = jnp.einsum("bnd,bdh->bnh", xx, W1, precision=_PREC) + B1
        hh = jnp.maximum(z1, 0.0)
        return jnp.einsum("bnh,bho->bno", hh, W2, precision=_PREC) + B2

    # fast_params[name] = param[None].repeat(meta_batch_size, ...)
    params = tuple(jnp.broadcast_to(p[None], (b_,) + p.shape) for p in (w1, b1, w2, b2))

    intermed = []
    for j in range(num_meta_steps):
        def loss_fn(p, step=j):
            pred = hypo(p, x)
            task = jnp.mean((pred - y) ** 2)
            lam = ssl_weight / (1.0 + step)
            ssl = lam * sum(jnp.sum(q ** 2) for q in p)
            return task + ssl, pred

        (_, pred), grads = jax.value_and_grad(loss_fn, has_aux=True)(params)
        intermed.append(pred)
        params = tuple(p - lr * g for p, g in zip(params, grads))

    return hypo(params, x), jnp.stack(intermed, axis=0)


if __name__ == "__main__":
    key = jax.random.PRNGKey(0)
    ks = jax.random.split(key, 6)

    x = jax.random.normal(ks[0], (B, N, D_IN), jnp.float32)     # sampled_coords
    y = jax.random.normal(ks[1], (B, N, D_OUT), jnp.float32)    # sampled_data

    # Deterministic hypo-module init (PyTorch-Linear-style uniform bounds).
    bnd1 = 1.0 / (D_IN ** 0.5)
    bnd2 = 1.0 / (H ** 0.5)
    w1 = jax.random.uniform(ks[2], (D_IN, H), jnp.float32, -bnd1, bnd1)
    b1 = jax.random.uniform(ks[3], (1, H), jnp.float32, -bnd1, bnd1)
    w2 = jax.random.uniform(ks[4], (H, D_OUT), jnp.float32, -bnd2, bnd2)
    b2 = jax.random.uniform(ks[5], (1, D_OUT), jnp.float32, -bnd2, bnd2)

    out = maml_ssl_forward(x, y, w1, b1, w2, b2)
    jax.block_until_ready(out)

    ref_out, ref_interm = _ref_forward(x, y, w1, b1, w2, b2,
                                       NUM_META_STEPS, INIT_LR, SSL_WEIGHT)
    interm = jnp.stack(out["intermed_predictions"], axis=0)
    assert jnp.allclose(out["model_out"], ref_out, atol=1e-3, rtol=1e-3)
    assert jnp.allclose(interm, ref_interm, atol=1e-3, rtol=1e-3)

    print("KERNEL_OK")
</pallas_src>

<mosaic_0001>
module attributes {stable_mosaic.version = 11 : i64} {
  func.func @kernel(%arg0: memref<2x128xf32, #tpu.memory_space<vmem>>, %arg1: memref<1x128xf32, #tpu.memory_space<vmem>>, %arg2: memref<32x2xf32, #tpu.memory_space<vmem>>, %arg3: memref<32x1xf32, #tpu.memory_space<vmem>>, %arg4: memref<32x1xf32, #tpu.memory_space<vmem>>, %arg5: memref<1x1xf32, #tpu.memory_space<vmem>>, %arg6: memref<1x128xf32, #tpu.memory_space<vmem>>, %arg7: memref<3x1x128xf32, #tpu.memory_space<vmem>>) attributes {dimension_semantics = [], scalar_prefetch = 0 : i64, scratch_operands = 0 : i64, tpu.core_type = #tpu.core_type<tc>} {
    %c0 = arith.constant 0 : index
    %c0_0 = arith.constant 0 : index
    %0 = vector.load %arg1[%c0, %c0_0] : memref<1x128xf32, #tpu.memory_space<vmem>>, vector<1x128xf32>
    %c0_1 = arith.constant 0 : index
    %c0_2 = arith.constant 0 : index
    %1 = vector.load %arg0[%c0_1, %c0_2] : memref<2x128xf32, #tpu.memory_space<vmem>>, vector<1x128xf32>
    %c1 = arith.constant 1 : index
    %c0_3 = arith.constant 0 : index
    %2 = vector.load %arg0[%c1, %c0_3] : memref<2x128xf32, #tpu.memory_space<vmem>>, vector<1x128xf32>
    %c0_4 = arith.constant 0 : index
    %c0_5 = arith.constant 0 : index
    %3 = vector.load %arg2[%c0_4, %c0_5] : memref<32x2xf32, #tpu.memory_space<vmem>>, vector<32x1xf32>
    %4 = vector.shape_cast %3 : vector<32x1xf32> to vector<32x1xf32>
    %5 = vector.broadcast %4 : vector<32x1xf32> to vector<32x128xf32>
    %c0_6 = arith.constant 0 : index
    %c1_7 = arith.constant 1 : index
    %6 = vector.load %arg2[%c0_6, %c1_7] : memref<32x2xf32, #tpu.memory_space<vmem>>, vector<32x1xf32>
    %7 = vector.shape_cast %6 : vector<32x1xf32> to vector<32x1xf32>
    %8 = vector.broadcast %7 : vector<32x1xf32> to vector<32x128xf32>
    %c0_8 = arith.constant 0 : index
    %c0_9 = arith.constant 0 : index
    %9 = vector.load %arg3[%c0_8, %c0_9] : memref<32x1xf32, #tpu.memory_space<vmem>>, vector<32x1xf32>
    %10 = vector.shape_cast %9 : vector<32x1xf32> to vector<32x1xf32>
    %11 = vector.broadcast %10 : vector<32x1xf32> to vector<32x128xf32>
    %c0_10 = arith.constant 0 : index
    %c0_11 = arith.constant 0 : index
    %12 = vector.load %arg4[%c0_10, %c0_11] : memref<32x1xf32, #tpu.memory_space<vmem>>, vector<32x1xf32>
    %13 = vector.shape_cast %12 : vector<32x1xf32> to vector<32x1xf32>
    %14 = vector.broadcast %13 : vector<32x1xf32> to vector<32x128xf32>
    %c0_12 = arith.constant 0 : index
    %c0_13 = arith.constant 0 : index
    %15 = vector.load %arg5[%c0_12, %c0_13] : memref<1x1xf32, #tpu.memory_space<vmem>>, vector<1x1xf32>
    %16 = vector.shape_cast %15 : vector<1x1xf32> to vector<1x1xf32>
    %17 = vector.broadcast %16 : vector<1x1xf32> to vector<1x128xf32>
    %18 = tpu.iota {dimensions = array<i32: 1>} : vector<1x128xi32>
    %c0_i32 = arith.constant 0 : i32
    %19 = vector.broadcast %c0_i32 : i32 to vector<1x128xi32>
    %20 = arith.cmpi sge, %18, %19 : vector<1x128xi32>
    %c64_i32 = arith.constant 64 : i32
    %21 = vector.broadcast %c64_i32 : i32 to vector<1x128xi32>
    %22 = arith.cmpi slt, %18, %21 : vector<1x128xi32>
    %23 = arith.andi %20, %22 : vector<1x128xi1>
    %24 = arith.extui %23 : vector<1x128xi1> to vector<1x128xi32>
    %25 = arith.sitofp %24 : vector<1x128xi32> to vector<1x128xf32>
    %c64_i32_14 = arith.constant 64 : i32
    %26 = vector.broadcast %c64_i32_14 : i32 to vector<1x128xi32>
    %27 = arith.cmpi sge, %18, %26 : vector<1x128xi32>
    %c128_i32 = arith.constant 128 : i32
    %28 = vector.broadcast %c128_i32 : i32 to vector<1x128xi32>
    %29 = arith.cmpi slt, %18, %28 : vector<1x128xi32>
    %30 = arith.andi %27, %29 : vector<1x128xi1>
    %31 = arith.extui %30 : vector<1x128xi1> to vector<1x128xi32>
    %32 = arith.sitofp %31 : vector<1x128xi32> to vector<1x128xf32>
    %33 = vector.broadcast %1 : vector<1x128xf32> to vector<32x128xf32>
    %34 = arith.mulf %5, %33 : vector<32x128xf32>
    %35 = arith.addf %11, %34 : vector<32x128xf32>
    %36 = vector.broadcast %2 : vector<1x128xf32> to vector<32x128xf32>
    %37 = arith.mulf %8, %36 : vector<32x128xf32>
    %38 = arith.addf %35, %37 : vector<32x128xf32>
    %cst = arith.constant 0.000000e+00 : f32
    %39 = vector.broadcast %cst : f32 to vector<32x128xf32>
    %40 = arith.maximumf %38, %39 : vector<32x128xf32>
    %41 = arith.mulf %14, %40 : vector<32x128xf32>
    %cst_15 = arith.constant dense<0.000000e+00> : vector<128xf32>
    %42 = vector.multi_reduction <add>, %41, %cst_15 [0] : vector<32x128xf32> to vector<128xf32>
    %43 = vector.shape_cast %42 : vector<128xf32> to vector<1x128xf32>
    %44 = arith.addf %43, %17 : vector<1x128xf32>
    %c0_16 = arith.constant 0 : index
    %c0_17 = arith.constant 0 : index
    %c0_18 = arith.constant 0 : index
    %45 = vector.load %arg7[%c0_16, %c0_17, %c0_18] : memref<3x1x128xf32, #tpu.memory_space<vmem>>, vector<1x1x128xf32>
    %46 = vector.shape_cast %45 : vector<1x1x128xf32> to vector<1x128xf32>
    %47 = vector.shape_cast %44 : vector<1x128xf32> to vector<1x1x128xf32>
    tpu.vector_store %arg7[%c0_16, %c0_17, %c0_18], %47 {strides = array<i32>} : memref<3x1x128xf32, #tpu.memory_space<vmem>>, vector<1x1x128xf32>,
    %48 = arith.subf %44, %0 : vector<1x128xf32>
    %cst_19 = arith.constant 1.562500e-04 : f32
    %49 = vector.broadcast %cst_19 : f32 to vector<1x128xf32>
    %50 = arith.mulf %49, %48 : vector<1x128xf32>
    %51 = vector.broadcast %50 : vector<1x128xf32> to vector<32x128xf32>
    %52 = arith.mulf %40, %51 : vector<32x128xf32>
    %cst_20 = arith.constant 0.000000e+00 : f32
    %53 = vector.broadcast %cst_20 : f32 to vector<32x128xf32>
    %54 = vector.broadcast %25 : vector<1x128xf32> to vector<32x128xf32>
    %55 = arith.mulf %52, %54 : vector<32x128xf32>
    %cst_21 = arith.constant dense<0.000000e+00> : vector<32xf32>
    %56 = vector.multi_reduction <add>, %55, %cst_21 [1] : vector<32x128xf32> to vector<32xf32>
    %57 = vector.shape_cast %56 : vector<32xf32> to vector<32x1xf32>
    %58 = vector.broadcast %57 : vector<32x1xf32> to vector<32x128xf32>
    %59 = vector.broadcast %25 : vector<1x128xf32> to vector<32x128xf32>
    %60 = arith.mulf %58, %59 : vector<32x128xf32>
    %61 = arith.addf %53, %60 : vector<32x128xf32>
    %62 = vector.broadcast %32 : vector<1x128xf32> to vector<32x128xf32>
    %63 = arith.mulf %52, %62 : vector<32x128xf32>
    %cst_22 = arith.constant dense<0.000000e+00> : vector<32xf32>
    %64 = vector.multi_reduction <add>, %63, %cst_22 [1] : vector<32x128xf32> to vector<32xf32>
    %65 = vector.shape_cast %64 : vector<32xf32> to vector<32x1xf32>
    %66 = vector.broadcast %65 : vector<32x1xf32> to vector<32x128xf32>
    %67 = vector.broadcast %32 : vector<1x128xf32> to vector<32x128xf32>
    %68 = arith.mulf %66, %67 : vector<32x128xf32>
    %69 = arith.addf %61, %68 : vector<32x128xf32>
    %cst_23 = arith.constant 0.000000e+00 : f32
    %70 = vector.broadcast %cst_23 : f32 to vector<1x128xf32>
    %71 = arith.mulf %50, %25 : vector<1x128xf32>
    %cst_24 = arith.constant dense<0.000000e+00> : vector<1xf32>
    %72 = vector.multi_reduction <add>, %71, %cst_24 [1] : vector<1x128xf32> to vector<1xf32>
    %73 = vector.shape_cast %72 : vector<1xf32> to vector<1x1xf32>
    %74 = vector.broadcast %73 : vector<1x1xf32> to vector<1x128xf32>
    %75 = arith.mulf %74, %25 : vector<1x128xf32>
    %76 = arith.addf %70, %75 : vector<1x128xf32>
    %77 = arith.mulf %50, %32 : vector<1x128xf32>
    %cst_25 = arith.constant dense<0.000000e+00> : vector<1xf32>
    %78 = vector.multi_reduction <add>, %77, %cst_25 [1] : vector<1x128xf32> to vector<1xf32>
    %79 = vector.shape_cast %78 : vector<1xf32> to vector<1x1xf32>
    %80 = vector.broadcast %79 : vector<1x1xf32> to vector<1x128xf32>
    %81 = arith.mulf %80, %32 : vector<1x128xf32>
    %82 = arith.addf %76, %81 : vector<1x128xf32>
    %83 = vector.broadcast %50 : vector<1x128xf32> to vector<32x128xf32>
    %84 = arith.mulf %14, %83 : vector<32x128xf32>
    %cst_26 = arith.constant 0.000000e+00 : f32
    %85 = vector.broadcast %cst_26 : f32 to vector<32x128xf32>
    %86 = arith.cmpf ogt, %38, %85 : vector<32x128xf32>
    %cst_27 = arith.constant 0.000000e+00 : f32
    %87 = vector.broadcast %cst_27 : f32 to vector<32x128xf32>
    %88 = arith.select %86, %84, %87 : vector<32x128xi1>, vector<32x128xf32>
    %89 = vector.broadcast %1 : vector<1x128xf32> to vector<32x128xf32>
    %90 = arith.mulf %88, %89 : vector<32x128xf32>
    %cst_28 = arith.constant 0.000000e+00 : f32
    %91 = vector.broadcast %cst_28 : f32 to vector<32x128xf32>
    %92 = vector.broadcast %25 : vector<1x128xf32> to vector<32x128xf32>
    %93 = arith.mulf %90, %92 : vector<32x128xf32>
    %cst_29 = arith.constant dense<0.000000e+00> : vector<32xf32>
    %94 = vector.multi_reduction <add>, %93, %cst_29 [1] : vector<32x128xf32> to vector<32xf32>
    %95 = vector.shape_cast %94 : vector<32xf32> to vector<32x1xf32>
    %96 = vector.broadcast %95 : vector<32x1xf32> to vector<32x128xf32>
    %97 = vector.broadcast %25 : vector<1x128xf32> to vector<32x128xf32>
    %98 = arith.mulf %96, %97 : vector<32x128xf32>
    %99 = arith.addf %91, %98 : vector<32x128xf32>
    %100 = vector.broadcast %32 : vector<1x128xf32> to vector<32x128xf32>
    %101 = arith.mulf %90, %100 : vector<32x128xf32>
    %cst_30 = arith.constant dense<0.000000e+00> : vector<32xf32>
    %102 = vector.multi_reduction <add>, %101, %cst_30 [1] : vector<32x128xf32> to vector<32xf32>
    %103 = vector.shape_cast %102 : vector<32xf32> to vector<32x1xf32>
    %104 = vector.broadcast %103 : vector<32x1xf32> to vector<32x128xf32>
    %105 = vector.broadcast %32 : vector<1x128xf32> to vector<32x128xf32>
    %106 = arith.mulf %104, %105 : vector<32x128xf32>
    %107 = arith.addf %99, %106 : vector<32x128xf32>
    %108 = vector.broadcast %2 : vector<1x128xf32> to vector<32x128xf32>
    %109 = arith.mulf %88, %108 : vector<32x128xf32>
    %cst_31 = arith.constant 0.000000e+00 : f32
    %110 = vector.broadcast %cst_31 : f32 to vector<32x128xf32>
    %111 = vector.broadcast %25 : vector<1x128xf32> to vector<32x128xf32>
    %112 = arith.mulf %109, %111 : vector<32x128xf32>
    %cst_32 = arith.constant dense<0.000000e+00> : vector<32xf32>
    %113 = vector.multi_reduction <add>, %112, %cst_32 [1] : vector<32x128xf32> to vector<32xf32>
    %114 = vector.shape_cast %113 : vector<32xf32> to vector<32x1xf32>
    %115 = vector.broadcast %114 : vector<32x1xf32> to vector<32x128xf32>
    %116 = vector.broadcast %25 : vector<1x128xf32> to vector<32x128xf32>
    %117 = arith.mulf %115, %116 : vector<32x128xf32>
    %118 = arith.addf %110, %117 : vector<32x128xf32>
    %119 = vector.broadcast %32 : vector<1x128xf32> to vector<32x128xf32>
    %120 = arith.mulf %109, %119 : vector<32x128xf32>
    %cst_33 = arith.constant dense<0.000000e+00> : vector<32xf32>
    %121 = vector.multi_reduction <add>, %120, %cst_33 [1] : vector<32x128xf32> to vector<32xf32>
    %122 = vector.shape_cast %121 : vector<32xf32> to vector<32x1xf32>
    %123 = vector.broadcast %122 : vector<32x1xf32> to vector<32x128xf32>
    %124 = vector.broadcast %32 : vector<1x128xf32> to vector<32x128xf32>
    %125 = arith.mulf %123, %124 : vector<32x128xf32>
    %126 = arith.addf %118, %125 : vector<32x128xf32>
    %cst_34 = arith.constant 0.000000e+00 : f32
    %127 = vector.broadcast %cst_34 : f32 to vector<32x128xf32>
    %128 = vector.broadcast %25 : vector<1x128xf32> to vector<32x128xf32>
    %129 = arith.mulf %88, %128 : vector<32x128xf32>
    %cst_35 = arith.constant dense<0.000000e+00> : vector<32xf32>
    %130 = vector.multi_reduction <add>, %129, %cst_35 [1] : vector<32x128xf32> to vector<32xf32>
    %131 = vector.shape_cast %130 : vector<32xf32> to vector<32x1xf32>
    %132 = vector.broadcast %131 : vector<32x1xf32> to vector<32x128xf32>
    %133 = vector.broadcast %25 : vector<1x128xf32> to vector<32x128xf32>
    %134 = arith.mulf %132, %133 : vector<32x128xf32>
    %135 = arith.addf %127, %134 : vector<32x128xf32>
    %136 = vector.broadcast %32 : vector<1x128xf32> to vector<32x128xf32>
    %137 = arith.mulf %88, %136 : vector<32x128xf32>
    %cst_36 = arith.constant dense<0.000000e+00> : vector<32xf32>
    %138 = vector.multi_reduction <add>, %137, %cst_36 [1] : vector<32x128xf32> to vector<32xf32>
    %139 = vector.shape_cast %138 : vector<32xf32> to vector<32x1xf32>
    %140 = vector.broadcast %139 : vector<32x1xf32> to vector<32x128xf32>
    %141 = vector.broadcast %32 : vector<1x128xf32> to vector<32x128xf32>
    %142 = arith.mulf %140, %141 : vector<32x128xf32>
    %143 = arith.addf %135, %142 : vector<32x128xf32>
    %cst_37 = arith.constant 0.999979972 : f32
    %144 = vector.broadcast %cst_37 : f32 to vector<32x128xf32>
    %145 = arith.mulf %144, %5 : vector<32x128xf32>
    %146 = arith.subf %145, %107 : vector<32x128xf32>
    %cst_38 = arith.constant 0.999979972 : f32
    %147 = vector.broadcast %cst_38 : f32 to vector<32x128xf32>
    %148 = arith.mulf %147, %8 : vector<32x128xf32>
    %149 = arith.subf %148, %126 : vector<32x128xf32>
    %cst_39 = arith.constant 0.999979972 : f32
    %150 = vector.broadcast %cst_39 : f32 to vector<32x128xf32>
    %151 = arith.mulf %150, %11 : vector<32x128xf32>
    %152 = arith.subf %151, %143 : vector<32x128xf32>
    %cst_40 = arith.constant 0.999979972 : f32
    %153 = vector.broadcast %cst_40 : f32 to vector<32x128xf32>
    %154 = arith.mulf %153, %14 : vector<32x128xf32>
    %155 = arith.subf %154, %69 : vector<32x128xf32>
    %cst_41 = arith.constant 0.999979972 : f32
    %156 = vector.broadcast %cst_41 : f32 to vector<1x128xf32>
    %157 = arith.mulf %156, %17 : vector<1x128xf32>
    %158 = arith.subf %157, %82 : vector<1x128xf32>
    %159 = vector.broadcast %1 : vector<1x128xf32> to vector<32x128xf32>
    %160 = arith.mulf %146, %159 : vector<32x128xf32>
    %161 = arith.addf %152, %160 : vector<32x128xf32>
    %162 = vector.broadcast %2 : vector<1x128xf32> to vector<32x128xf32>
    %163 = arith.mulf %149, %162 : vector<32x128xf32>
    %164 = arith.addf %161, %163 : vector<32x128xf32>
    %cst_42 = arith.constant 0.000000e+00 : f32
    %165 = vector.broadcast %cst_42 : f32 to vector<32x128xf32>
    %166 = arith.maximumf %164, %165 : vector<32x128xf32>
    %167 = arith.mulf %155, %166 : vector<32x128xf32>
    %cst_43 = arith.constant dense<0.000000e+00> : vector<128xf32>
    %168 = vector.multi_reduction <add>, %167, %cst_43 [0] : vector<32x128xf32> to vector<128xf32>
    %169 = vector.shape_cast %168 : vector<128xf32> to vector<1x128xf32>
    %170 = arith.addf %169, %158 : vector<1x128xf32>
    %c1_44 = arith.constant 1 : index
    %c0_45 = arith.constant 0 : index
    %c0_46 = arith.constant 0 : index
    %171 = vector.load %arg7[%c1_44, %c0_45, %c0_46] : memref<3x1x128xf32, #tpu.memory_space<vmem>>, vector<1x1x128xf32>
    %172 = vector.shape_cast %171 : vector<1x1x128xf32> to vector<1x128xf32>
    %173 = vector.shape_cast %170 : vector<1x128xf32> to vector<1x1x128xf32>
    tpu.vector_store %arg7[%c1_44, %c0_45, %c0_46], %173 {strides = array<i32>} : memref<3x1x128xf32, #tpu.memory_space<vmem>>, vector<1x1x128xf32>,
    %174 = arith.subf %170, %0 : vector<1x128xf32>
    %cst_47 = arith.constant 1.562500e-04 : f32
    %175 = vector.broadcast %cst_47 : f32 to vector<1x128xf32>
    %176 = arith.mulf %175, %174 : vector<1x128xf32>
    %177 = vector.broadcast %176 : vector<1x128xf32> to vector<32x128xf32>
    %178 = arith.mulf %166, %177 : vector<32x128xf32>
    %cst_48 = arith.constant 0.000000e+00 : f32
    %179 = vector.broadcast %cst_48 : f32 to vector<32x128xf32>
    %180 = vector.broadcast %25 : vector<1x128xf32> to vector<32x128xf32>
    %181 = arith.mulf %178, %180 : vector<32x128xf32>
    %cst_49 = arith.constant dense<0.000000e+00> : vector<32xf32>
    %182 = vector.multi_reduction <add>, %181, %cst_49 [1] : vector<32x128xf32> to vector<32xf32>
    %183 = vector.shape_cast %182 : vector<32xf32> to vector<32x1xf32>
    %184 = vector.broadcast %183 : vector<32x1xf32> to vector<32x128xf32>
    %185 = vector.broadcast %25 : vector<1x128xf32> to vector<32x128xf32>
    %186 = arith.mulf %184, %185 : vector<32x128xf32>
    %187 = arith.addf %179, %186 : vector<32x128xf32>
    %188 = vector.broadcast %32 : vector<1x128xf32> to vector<32x128xf32>
    %189 = arith.mulf %178, %188 : vector<32x128xf32>
    %cst_50 = arith.constant dense<0.000000e+00> : vector<32xf32>
    %190 = vector.multi_reduction <add>, %189, %cst_50 [1] : vector<32x128xf32> to vector<32xf32>
    %191 = vector.shape_cast %190 : vector<32xf32> to vector<32x1xf32>
    %192 = vector.broadcast %191 : vector<32x1xf32> to vector<32x128xf32>
    %193 = vector.broadcast %32 : vector<1x128xf32> to vector<32x128xf32>
    %194 = arith.mulf %192, %193 : vector<32x128xf32>
    %195 = arith.addf %187, %194 : vector<32x128xf32>
    %cst_51 = arith.constant 0.000000e+00 : f32
    %196 = vector.broadcast %cst_51 : f32 to vector<1x128xf32>
    %197 = arith.mulf %176, %25 : vector<1x128xf32>
    %cst_52 = arith.constant dense<0.000000e+00> : vector<1xf32>
    %198 = vector.multi_reduction <add>, %197, %cst_52 [1] : vector<1x128xf32> to vector<1xf32>
    %199 = vector.shape_cast %198 : vector<1xf32> to vector<1x1xf32>
    %200 = vector.broadcast %199 : vector<1x1xf32> to vector<1x128xf32>
    %201 = arith.mulf %200, %25 : vector<1x128xf32>
    %202 = arith.addf %196, %201 : vector<1x128xf32>
    %203 = arith.mulf %176, %32 : vector<1x128xf32>
    %cst_53 = arith.constant dense<0.000000e+00> : vector<1xf32>
    %204 = vector.multi_reduction <add>, %203, %cst_53 [1] : vector<1x128xf32> to vector<1xf32>
    %205 = vector.shape_cast %204 : vector<1xf32> to vector<1x1xf32>
    %206 = vector.broadcast %205 : vector<1x1xf32> to vector<1x128xf32>
    %207 = arith.mulf %206, %32 : vector<1x128xf32>
    %208 = arith.addf %202, %207 : vector<1x128xf32>
    %209 = vector.broadcast %176 : vector<1x128xf32> to vector<32x128xf32>
    %210 = arith.mulf %155, %209 : vector<32x128xf32>
    %cst_54 = arith.constant 0.000000e+00 : f32
    %211 = vector.broadcast %cst_54 : f32 to vector<32x128xf32>
    %212 = arith.cmpf ogt, %164, %211 : vector<32x128xf32>
    %cst_55 = arith.constant 0.000000e+00 : f32
    %213 = vector.broadcast %cst_55 : f32 to vector<32x128xf32>
    %214 = arith.select %212, %210, %213 : vector<32x128xi1>, vector<32x128xf32>
    %215 = vector.broadcast %1 : vector<1x128xf32> to vector<32x128xf32>
    %216 = arith.mulf %214, %215 : vector<32x128xf32>
    %cst_56 = arith.constant 0.000000e+00 : f32
    %217 = vector.broadcast %cst_56 : f32 to vector<32x128xf32>
    %218 = vector.broadcast %25 : vector<1x128xf32> to vector<32x128xf32>
    %219 = arith.mulf %216, %218 : vector<32x128xf32>
    %cst_57 = arith.constant dense<0.000000e+00> : vector<32xf32>
    %220 = vector.multi_reduction <add>, %219, %cst_57 [1] : vector<32x128xf32> to vector<32xf32>
    %221 = vector.shape_cast %220 : vector<32xf32> to vector<32x1xf32>
    %222 = vector.broadcast %221 : vector<32x1xf32> to vector<32x128xf32>
    %223 = vector.broadcast %25 : vector<1x128xf32> to vector<32x128xf32>
    %224 = arith.mulf %222, %223 : vector<32x128xf32>
    %225 = arith.addf %217, %224 : vector<32x128xf32>
    %226 = vector.broadcast %32 : vector<1x128xf32> to vector<32x128xf32>
    %227 = arith.mulf %216, %226 : vector<32x128xf32>
    %cst_58 = arith.constant dense<0.000000e+00> : vector<32xf32>
    %228 = vector.multi_reduction <add>, %227, %cst_58 [1] : vector<32x128xf32> to vector<32xf32>
    %229 = vector.shape_cast %228 : vector<32xf32> to vector<32x1xf32>
    %230 = vector.broadcast %229 : vector<32x1xf32> to vector<32x128xf32>
    %231 = vector.broadcast %32 : vector<1x128xf32> to vector<32x128xf32>
    %232 = arith.mulf %230, %231 : vector<32x128xf32>
    %233 = arith.addf %225, %232 : vector<32x128xf32>
    %234 = vector.broadcast %2 : vector<1x128xf32> to vector<32x128xf32>
    %235 = arith.mulf %214, %234 : vector<32x128xf32>
    %cst_59 = arith.constant 0.000000e+00 : f32
    %236 = vector.broadcast %cst_59 : f32 to vector<32x128xf32>
    %237 = vector.broadcast %25 : vector<1x128xf32> to vector<32x128xf32>
    %238 = arith.mulf %235, %237 : vector<32x128xf32>
    %cst_60 = arith.constant dense<0.000000e+00> : vector<32xf32>
    %239 = vector.multi_reduction <add>, %238, %cst_60 [1] : vector<32x128xf32> to vector<32xf32>
    %240 = vector.shape_cast %239 : vector<32xf32> to vector<32x1xf32>
    %241 = vector.broadcast %240 : vector<32x1xf32> to vector<32x128xf32>
    %242 = vector.broadcast %25 : vector<1x128xf32> to vector<32x128xf32>
    %243 = arith.mulf %241, %242 : vector<32x128xf32>
    %244 = arith.addf %236, %243 : vector<32x128xf32>
    %245 = vector.broadcast %32 : vector<1x128xf32> to vector<32x128xf32>
    %246 = arith.mulf %235, %245 : vector<32x128xf32>
    %cst_61 = arith.constant dense<0.000000e+00> : vector<32xf32>
    %247 = vector.multi_reduction <add>, %246, %cst_61 [1] : vector<32x128xf32> to vector<32xf32>
    %248 = vector.shape_cast %247 : vector<32xf32> to vector<32x1xf32>
    %249 = vector.broadcast %248 : vector<32x1xf32> to vector<32x128xf32>
    %250 = vector.broadcast %32 : vector<1x128xf32> to vector<32x128xf32>
    %251 = arith.mulf %249, %250 : vector<32x128xf32>
    %252 = arith.addf %244, %251 : vector<32x128xf32>
    %cst_62 = arith.constant 0.000000e+00 : f32
    %253 = vector.broadcast %cst_62 : f32 to vector<32x128xf32>
    %254 = vector.broadcast %25 : vector<1x128xf32> to vector<32x128xf32>
    %255 = arith.mulf %214, %254 : vector<32x128xf32>
    %cst_63 = arith.constant dense<0.000000e+00> : vector<32xf32>
    %256 = vector.multi_reduction <add>, %255, %cst_63 [1] : vector<32x128xf32> to vector<32xf32>
    %257 = vector.shape_cast %256 : vector<32xf32> to vector<32x1xf32>
    %258 = vector.broadcast %257 : vector<32x1xf32> to vector<32x128xf32>
    %259 = vector.broadcast %25 : vector<1x128xf32> to vector<32x128xf32>
    %260 = arith.mulf %258, %259 : vector<32x128xf32>
    %261 = arith.addf %253, %260 : vector<32x128xf32>
    %262 = vector.broadcast %32 : vector<1x128xf32> to vector<32x128xf32>
    %263 = arith.mulf %214, %262 : vector<32x128xf32>
    %cst_64 = arith.constant dense<0.000000e+00> : vector<32xf32>
    %264 = vector.multi_reduction <add>, %263, %cst_64 [1] : vector<32x128xf32> to vector<32xf32>
    %265 = vector.shape_cast %264 : vector<32xf32> to vector<32x1xf32>
    %266 = vector.broadcast %265 : vector<32x1xf32> to vector<32x128xf32>
    %267 = vector.broadcast %32 : vector<1x128xf32> to vector<32x128xf32>
    %268 = arith.mulf %266, %267 : vector<32x128xf32>
    %269 = arith.addf %261, %268 : vector<32x128xf32>
    %cst_65 = arith.constant 0.999989986 : f32
    %270 = vector.broadcast %cst_65 : f32 to vector<32x128xf32>
    %271 = arith.mulf %270, %146 : vector<32x128xf32>
    %272 = arith.subf %271, %233 : vector<32x128xf32>
    %cst_66 = arith.constant 0.999989986 : f32
    %273 = vector.broadcast %cst_66 : f32 to vector<32x128xf32>
    %274 = arith.mulf %273, %149 : vector<32x128xf32>
    %275 = arith.subf %274, %252 : vector<32x128xf32>
    %cst_67 = arith.constant 0.999989986 : f32
    %276 = vector.broadcast %cst_67 : f32 to vector<32x128xf32>
    %277 = arith.mulf %276, %152 : vector<32x128xf32>
    %278 = arith.subf %277, %269 : vector<32x128xf32>
    %cst_68 = arith.constant 0.999989986 : f32
    %279 = vector.broadcast %cst_68 : f32 to vector<32x128xf32>
    %280 = arith.mulf %279, %155 : vector<32x128xf32>
    %281 = arith.subf %280, %195 : vector<32x128xf32>
    %cst_69 = arith.constant 0.999989986 : f32
    %282 = vector.broadcast %cst_69 : f32 to vector<1x128xf32>
    %283 = arith.mulf %282, %158 : vector<1x128xf32>
    %284 = arith.subf %283, %208 : vector<1x128xf32>
    %285 = vector.broadcast %1 : vector<1x128xf32> to vector<32x128xf32>
    %286 = arith.mulf %272, %285 : vector<32x128xf32>
    %287 = arith.addf %278, %286 : vector<32x128xf32>
    %288 = vector.broadcast %2 : vector<1x128xf32> to vector<32x128xf32>
    %289 = arith.mulf %275, %288 : vector<32x128xf32>
    %290 = arith.addf %287, %289 : vector<32x128xf32>
    %cst_70 = arith.constant 0.000000e+00 : f32
    %291 = vector.broadcast %cst_70 : f32 to vector<32x128xf32>
    %292 = arith.maximumf %290, %291 : vector<32x128xf32>
    %293 = arith.mulf %281, %292 : vector<32x128xf32>
    %cst_71 = arith.constant dense<0.000000e+00> : vector<128xf32>
    %294 = vector.multi_reduction <add>, %293, %cst_71 [0] : vector<32x128xf32> to vector<128xf32>
    %295 = vector.shape_cast %294 : vector<128xf32> to vector<1x128xf32>
    %296 = arith.addf %295, %284 : vector<1x128xf32>
    %c2 = arith.constant 2 : index
    %c0_72 = arith.constant 0 : index
    %c0_73 = arith.constant 0 : index
    %297 = vector.load %arg7[%c2, %c0_72, %c0_73] : memref<3x1x128xf32, #tpu.memory_space<vmem>>, vector<1x1x128xf32>
    %298 = vector.shape_cast %297 : vector<1x1x128xf32> to vector<1x128xf32>
    %299 = vector.shape_cast %296 : vector<1x128xf32> to vector<1x1x128xf32>
    tpu.vector_store %arg7[%c2, %c0_72, %c0_73], %299 {strides = array<i32>} : memref<3x1x128xf32, #tpu.memory_space<vmem>>, vector<1x1x128xf32>,
    %300 = arith.subf %296, %0 : vector<1x128xf32>
    %cst_74 = arith.constant 1.562500e-04 : f32
    %301 = vector.broadcast %cst_74 : f32 to vector<1x128xf32>
    %302 = arith.mulf %301, %300 : vector<1x128xf32>
    %303 = vector.broadcast %302 : vector<1x128xf32> to vector<32x128xf32>
    %304 = arith.mulf %292, %303 : vector<32x128xf32>
    %cst_75 = arith.constant 0.000000e+00 : f32
    %305 = vector.broadcast %cst_75 : f32 to vector<32x128xf32>
    %306 = vector.broadcast %25 : vector<1x128xf32> to vector<32x128xf32>
    %307 = arith.mulf %304, %306 : vector<32x128xf32>
    %cst_76 = arith.constant dense<0.000000e+00> : vector<32xf32>
    %308 = vector.multi_reduction <add>, %307, %cst_76 [1] : vector<32x128xf32> to vector<32xf32>
    %309 = vector.shape_cast %308 : vector<32xf32> to vector<32x1xf32>
    %310 = vector.broadcast %309 : vector<32x1xf32> to vector<32x128xf32>
    %311 = vector.broadcast %25 : vector<1x128xf32> to vector<32x128xf32>
    %312 = arith.mulf %310, %311 : vector<32x128xf32>
    %313 = arith.addf %305, %312 : vector<32x128xf32>
    %314 = vector.broadcast %32 : vector<1x128xf32> to vector<32x128xf32>
    %315 = arith.mulf %304, %314 : vector<32x128xf32>
    %cst_77 = arith.constant dense<0.000000e+00> : vector<32xf32>
    %316 = vector.multi_reduction <add>, %315, %cst_77 [1] : vector<32x128xf32> to vector<32xf32>
    %317 = vector.shape_cast %316 : vector<32xf32> to vector<32x1xf32>
    %318 = vector.broadcast %317 : vector<32x1xf32> to vector<32x128xf32>
    %319 = vector.broadcast %32 : vector<1x128xf32> to vector<32x128xf32>
    %320 = arith.mulf %318, %319 : vector<32x128xf32>
    %321 = arith.addf %313, %320 : vector<32x128xf32>
    %cst_78 = arith.constant 0.000000e+00 : f32
    %322 = vector.broadcast %cst_78 : f32 to vector<1x128xf32>
    %323 = arith.mulf %302, %25 : vector<1x128xf32>
    %cst_79 = arith.constant dense<0.000000e+00> : vector<1xf32>
    %324 = vector.multi_reduction <add>, %323, %cst_79 [1] : vector<1x128xf32> to vector<1xf32>
    %325 = vector.shape_cast %324 : vector<1xf32> to vector<1x1xf32>
    %326 = vector.broadcast %325 : vector<1x1xf32> to vector<1x128xf32>
    %327 = arith.mulf %326, %25 : vector<1x128xf32>
    %328 = arith.addf %322, %327 : vector<1x128xf32>
    %329 = arith.mulf %302, %32 : vector<1x128xf32>
    %cst_80 = arith.constant dense<0.000000e+00> : vector<1xf32>
    %330 = vector.multi_reduction <add>, %329, %cst_80 [1] : vector<1x128xf32> to vector<1xf32>
    %331 = vector.shape_cast %330 : vector<1xf32> to vector<1x1xf32>
    %332 = vector.broadcast %331 : vector<1x1xf32> to vector<1x128xf32>
    %333 = arith.mulf %332, %32 : vector<1x128xf32>
    %334 = arith.addf %328, %333 : vector<1x128xf32>
    %335 = vector.broadcast %302 : vector<1x128xf32> to vector<32x128xf32>
    %336 = arith.mulf %281, %335 : vector<32x128xf32>
    %cst_81 = arith.constant 0.000000e+00 : f32
    %337 = vector.broadcast %cst_81 : f32 to vector<32x128xf32>
    %338 = arith.cmpf ogt, %290, %337 : vector<32x128xf32>
    %cst_82 = arith.constant 0.000000e+00 : f32
    %339 = vector.broadcast %cst_82 : f32 to vector<32x128xf32>
    %340 = arith.select %338, %336, %339 : vector<32x128xi1>, vector<32x128xf32>
    %341 = vector.broadcast %1 : vector<1x128xf32> to vector<32x128xf32>
    %342 = arith.mulf %340, %341 : vector<32x128xf32>
    %cst_83 = arith.constant 0.000000e+00 : f32
    %343 = vector.broadcast %cst_83 : f32 to vector<32x128xf32>
    %344 = vector.broadcast %25 : vector<1x128xf32> to vector<32x128xf32>
    %345 = arith.mulf %342, %344 : vector<32x128xf32>
    %cst_84 = arith.constant dense<0.000000e+00> : vector<32xf32>
    %346 = vector.multi_reduction <add>, %345, %cst_84 [1] : vector<32x128xf32> to vector<32xf32>
    %347 = vector.shape_cast %346 : vector<32xf32> to vector<32x1xf32>
    %348 = vector.broadcast %347 : vector<32x1xf32> to vector<32x128xf32>
    %349 = vector.broadcast %25 : vector<1x128xf32> to vector<32x128xf32>
    %350 = arith.mulf %348, %349 : vector<32x128xf32>
    %351 = arith.addf %343, %350 : vector<32x128xf32>
    %352 = vector.broadcast %32 : vector<1x128xf32> to vector<32x128xf32>
    %353 = arith.mulf %342, %352 : vector<32x128xf32>
    %cst_85 = arith.constant dense<0.000000e+00> : vector<32xf32>
    %354 = vector.multi_reduction <add>, %353, %cst_85 [1] : vector<32x128xf32> to vector<32xf32>
    %355 = vector.shape_cast %354 : vector<32xf32> to vector<32x1xf32>
    %356 = vector.broadcast %355 : vector<32x1xf32> to vector<32x128xf32>
    %357 = vector.broadcast %32 : vector<1x128xf32> to vector<32x128xf32>
    %358 = arith.mulf %356, %357 : vector<32x128xf32>
    %359 = arith.addf %351, %358 : vector<32x128xf32>
    %360 = vector.broadcast %2 : vector<1x128xf32> to vector<32x128xf32>
    %361 = arith.mulf %340, %360 : vector<32x128xf32>
    %cst_86 = arith.constant 0.000000e+00 : f32
    %362 = vector.broadcast %cst_86 : f32 to vector<32x128xf32>
    %363 = vector.broadcast %25 : vector<1x128xf32> to vector<32x128xf32>
    %364 = arith.mulf %361, %363 : vector<32x128xf32>
    %cst_87 = arith.constant dense<0.000000e+00> : vector<32xf32>
    %365 = vector.multi_reduction <add>, %364, %cst_87 [1] : vector<32x128xf32> to vector<32xf32>
    %366 = vector.shape_cast %365 : vector<32xf32> to vector<32x1xf32>
    %367 = vector.broadcast %366 : vector<32x1xf32> to vector<32x128xf32>
    %368 = vector.broadcast %25 : vector<1x128xf32> to vector<32x128xf32>
    %369 = arith.mulf %367, %368 : vector<32x128xf32>
    %370 = arith.addf %362, %369 : vector<32x128xf32>
    %371 = vector.broadcast %32 : vector<1x128xf32> to vector<32x128xf32>
    %372 = arith.mulf %361, %371 : vector<32x128xf32>
    %cst_88 = arith.constant dense<0.000000e+00> : vector<32xf32>
    %373 = vector.multi_reduction <add>, %372, %cst_88 [1] : vector<32x128xf32> to vector<32xf32>
    %374 = vector.shape_cast %373 : vector<32xf32> to vector<32x1xf32>
    %375 = vector.broadcast %374 : vector<32x1xf32> to vector<32x128xf32>
    %376 = vector.broadcast %32 : vector<1x128xf32> to vector<32x128xf32>
    %377 = arith.mulf %375, %376 : vector<32x128xf32>
    %378 = arith.addf %370, %377 : vector<32x128xf32>
    %cst_89 = arith.constant 0.000000e+00 : f32
    %379 = vector.broadcast %cst_89 : f32 to vector<32x128xf32>
    %380 = vector.broadcast %25 : vector<1x128xf32> to vector<32x128xf32>
    %381 = arith.mulf %340, %380 : vector<32x128xf32>
    %cst_90 = arith.constant dense<0.000000e+00> : vector<32xf32>
    %382 = vector.multi_reduction <add>, %381, %cst_90 [1] : vector<32x128xf32> to vector<32xf32>
    %383 = vector.shape_cast %382 : vector<32xf32> to vector<32x1xf32>
    %384 = vector.broadcast %383 : vector<32x1xf32> to vector<32x128xf32>
    %385 = vector.broadcast %25 : vector<1x128xf32> to vector<32x128xf32>
    %386 = arith.mulf %384, %385 : vector<32x128xf32>
    %387 = arith.addf %379, %386 : vector<32x128xf32>
    %388 = vector.broadcast %32 : vector<1x128xf32> to vector<32x128xf32>
    %389 = arith.mulf %340, %388 : vector<32x128xf32>
    %cst_91 = arith.constant dense<0.000000e+00> : vector<32xf32>
    %390 = vector.multi_reduction <add>, %389, %cst_91 [1] : vector<32x128xf32> to vector<32xf32>
    %391 = vector.shape_cast %390 : vector<32xf32> to vector<32x1xf32>
    %392 = vector.broadcast %391 : vector<32x1xf32> to vector<32x128xf32>
    %393 = vector.broadcast %32 : vector<1x128xf32> to vector<32x128xf32>
    %394 = arith.mulf %392, %393 : vector<32x128xf32>
    %395 = arith.addf %387, %394 : vector<32x128xf32>
    %cst_92 = arith.constant 0.999993324 : f32
    %396 = vector.broadcast %cst_92 : f32 to vector<32x128xf32>
    %397 = arith.mulf %396, %272 : vector<32x128xf32>
    %398 = arith.subf %397, %359 : vector<32x128xf32>
    %cst_93 = arith.constant 0.999993324 : f32
    %399 = vector.broadcast %cst_93 : f32 to vector<32x128xf32>
    %400 = arith.mulf %399, %275 : vector<32x128xf32>
    %401 = arith.subf %400, %378 : vector<32x128xf32>
    %cst_94 = arith.constant 0.999993324 : f32
    %402 = vector.broadcast %cst_94 : f32 to vector<32x128xf32>
    %403 = arith.mulf %402, %278 : vector<32x128xf32>
    %404 = arith.subf %403, %395 : vector<32x128xf32>
    %cst_95 = arith.constant 0.999993324 : f32
    %405 = vector.broadcast %cst_95 : f32 to vector<32x128xf32>
    %406 = arith.mulf %405, %281 : vector<32x128xf32>
    %407 = arith.subf %406, %321 : vector<32x128xf32>
    %cst_96 = arith.constant 0.999993324 : f32
    %408 = vector.broadcast %cst_96 : f32 to vector<1x128xf32>
    %409 = arith.mulf %408, %284 : vector<1x128xf32>
    %410 = arith.subf %409, %334 : vector<1x128xf32>
    %411 = vector.broadcast %1 : vector<1x128xf32> to vector<32x128xf32>
    %412 = arith.mulf %398, %411 : vector<32x128xf32>
    %413 = arith.addf %404, %412 : vector<32x128xf32>
    %414 = vector.broadcast %2 : vector<1x128xf32> to vector<32x128xf32>
    %415 = arith.mulf %401, %414 : vector<32x128xf32>
    %416 = arith.addf %413, %415 : vector<32x128xf32>
    %cst_97 = arith.constant 0.000000e+00 : f32
    %417 = vector.broadcast %cst_97 : f32 to vector<32x128xf32>
    %418 = arith.maximumf %416, %417 : vector<32x128xf32>
    %419 = arith.mulf %407, %418 : vector<32x128xf32>
    %cst_98 = arith.constant dense<0.000000e+00> : vector<128xf32>
    %420 = vector.multi_reduction <add>, %419, %cst_98 [0] : vector<32x128xf32> to vector<128xf32>
    %421 = vector.shape_cast %420 : vector<128xf32> to vector<1x128xf32>
    %422 = arith.addf %421, %410 : vector<1x128xf32>
    %c0_99 = arith.constant 0 : index
    %c0_100 = arith.constant 0 : index
    %423 = vector.load %arg6[%c0_99, %c0_100] : memref<1x128xf32, #tpu.memory_space<vmem>>, vector<1x128xf32>
    tpu.vector_store %arg6[%c0_99, %c0_100], %422 {strides = array<i32>} : memref<1x128xf32, #tpu.memory_space<vmem>>, vector<1x128xf32>,
    return
  }
}

</mosaic_0001>

<llo_original>
// kernel: tpu_custom_call.1
$region0: #{tpu_custom_call.1}
  #allocation0 [shape = 'u32[]', space=smem, size = 0x4, offset = 0x4, fixed_abs, tag = 'smem constant byte address 0x4 - core index']
  #allocation1 [shape = 'u32[144,128]{1,0:T(1,128)}', space=vmem, size = 0x12000, scoped, tag = 'internal scratch']
  #allocation2 [shape = 'f32[1,1]{1,0:T(1,128)S(1)}', space=vmem, size = 0x200, scoped, tag = 'scoped memory for tpu_custom_call.1']
  %s0 = inlined_call_operand.vmem [shape: f32[2,128], index: 0, kind: input, shape index: {}]
  %s1 = inlined_call_operand.vmem [shape: f32[1,128], index: 1, kind: input, shape index: {}]
  %s2 = inlined_call_operand.vmem [shape: f32[32,2], index: 2, kind: input, shape index: {}]
  %s3 = inlined_call_operand.vmem [shape: f32[32,1], index: 3, kind: input, shape index: {}]
  %s4 = inlined_call_operand.vmem [shape: f32[32,1], index: 4, kind: input, shape index: {}]
  %s5 = inlined_call_operand.<no memory space> [shape: f32[1,1], index: 5, kind: input, shape index: {}]
  %s6 = inlined_call_operand.hbm [shape: f32[1,128], index: 6, kind: output, shape index: {0}]
  %s7 = inlined_call_operand.hbm [shape: f32[3,1,128], index: 7, kind: output, shape index: {1}]
  %8 = xla_tuple %s6, %s7
  %s9 = sld [smem:[#allocation0]]
  $region42: #{tpu_custom_call.1} parent=0
    _
  %s11 = ssub.s32 1, %s9
  %s12 = scalar_select 0, %s11, %s9
  %v13 = vstv %s5
  %14 = vst [vmem:[#allocation2] sm:$0x1] %v13
  $region1: #{tpu_custom_call.1} parent=0
    #allocation3 [shape = 'u8[512]{0}', space=vmem, size = 0x400, scoped, tag = 'output window, operand 0, single buffered']
    #allocation4 [shape = 's32[1]{0}', space=sflag, size = 0x4, scoped, tag = 'scoped memory for tpu_custom_call.1']
    #allocation5 [shape = 'u8[1536]{0}', space=vmem, size = 0x800, scoped, tag = 'output window, operand 1, single buffered']
    #allocation6 [shape = 's32[1]{0}', space=sflag, size = 0x4, scoped, tag = 'scoped memory for tpu_custom_call.1']
    %15 = vsyncpa [#allocation4], 0
    %16 = vsyncpa [#allocation6], 0
    // Predicated region
    $region2: #{tpu_custom_call.1} parent=1 // pred_check
      _
    $region3: #{tpu_custom_call.1} parent=1 // pred_check_branch
      %18 = sbr.rel (0) target = $region5
    $region4: #{tpu_custom_call.1} parent=1 // pred_region
      _
    $region5: #{tpu_custom_call.1} parent=1 // pred_fallthru
      _
    // Predicated region
    $region6: #{tpu_custom_call.1} parent=1 // pred_check
      _
    $region7: #{tpu_custom_call.1} parent=1 // pred_check_branch
      %20 = sbr.rel (0) target = $region9
    $region8: #{tpu_custom_call.1} parent=1 // pred_region
      _
    $region9: #{tpu_custom_call.1} parent=1 // pred_fallthru
      _
    // Predicated region
    $region10: #{tpu_custom_call.1} parent=1 // pred_check
      _
    $region11: #{tpu_custom_call.1} parent=1 // pred_check_branch
      %22 = sbr.rel (0) target = $region13
    $region12: #{tpu_custom_call.1} parent=1 // pred_region
      _
    $region13: #{tpu_custom_call.1} parent=1 // pred_fallthru
      _
    // Predicated region
    $region14: #{tpu_custom_call.1} parent=1 // pred_check
      _
    $region15: #{tpu_custom_call.1} parent=1 // pred_check_branch
      %24 = sbr.rel (0) target = $region17
    $region16: #{tpu_custom_call.1} parent=1 // pred_region
      _
    $region17: #{tpu_custom_call.1} parent=1 // pred_fallthru
      _
    // Predicated region
    $region18: #{tpu_custom_call.1} parent=1 // pred_check
      _
    $region19: #{tpu_custom_call.1} parent=1 // pred_check_branch
      %26 = sbr.rel (0) target = $region21
    $region20: #{tpu_custom_call.1} parent=1 // pred_region
      _
    $region21: #{tpu_custom_call.1} parent=1 // pred_fallthru
      _
    // Predicated region
    $region22: #{tpu_custom_call.1} parent=1 // pred_check
      _
    $region23: #{tpu_custom_call.1} parent=1 // pred_check_branch
      %28 = sbr.rel (0) target = $region25
    $region24: #{tpu_custom_call.1} parent=1 // pred_region
      _
    $region25: #{tpu_custom_call.1} parent=1 // pred_fallthru
      _
    %v29 = vld [vmem:[%s1] sm:$0x1]
    %v30 = vld [vmem:[%s0] sm:$0x1]
    %v31 = vld [vmem:[%s0 + $0x1] sm:$0x1]
    %v32 = vld [vmem:[%s2] sm:$0xff]
    %v33 = vld [vmem:[%s2 + $0x8] sm:$0xff]
    %v34 = vld [vmem:[%s2 + $0x10] sm:$0xff]
    %v35 = vld [vmem:[%s2 + $0x18] sm:$0xff]
    %37 = vset.pattern.permute.xlu0 0
    %38 = vperm.xlu0 %37, %v32
    %v39 = vpop.permute.xlu0 %38
    %42 = vset.pattern.permute.xlu0 0
    %43 = vperm.xlu0 %42, %v33
    %v44 = vpop.permute.xlu0 %43
    %47 = vset.pattern.permute.xlu0 0
    %48 = vperm.xlu0 %47, %v34
    %v49 = vpop.permute.xlu0 %48
    %52 = vset.pattern.permute.xlu0 0
    %53 = vperm.xlu0 %52, %v35
    %v54 = vpop.permute.xlu0 %53
    %56 = vset.pattern.permute.xlu0 1
    %57 = vperm.xlu0 %56, %v32
    %v58 = vpop.permute.xlu0 %57
    %60 = vset.pattern.permute.xlu0 1
    %61 = vperm.xlu0 %60, %v33
    %v62 = vpop.permute.xlu0 %61
    %64 = vset.pattern.permute.xlu0 1
    %65 = vperm.xlu0 %64, %v34
    %v66 = vpop.permute.xlu0 %65
    %68 = vset.pattern.permute.xlu0 1
    %69 = vperm.xlu0 %68, %v35
    %v70 = vpop.permute.xlu0 %69
    %v72 = vld [vmem:[%s3] sm:$0xff]
    %v73 = vld [vmem:[%s3 + $0x8] sm:$0xff]
    %v74 = vld [vmem:[%s3 + $0x10] sm:$0xff]
    %v75 = vld [vmem:[%s3 + $0x18] sm:$0xff]
    %77 = vset.pattern.permute.xlu0 0
    %78 = vperm.xlu0 %77, %v72
    %v79 = vpop.permute.xlu0 %78
    %82 = vset.pattern.permute.xlu0 0
    %83 = vperm.xlu0 %82, %v73
    %v84 = vpop.permute.xlu0 %83
    %87 = vset.pattern.permute.xlu0 0
    %88 = vperm.xlu0 %87, %v74
    %v89 = vpop.permute.xlu0 %88
    %92 = vset.pattern.permute.xlu0 0
    %93 = vperm.xlu0 %92, %v75
    %v94 = vpop.permute.xlu0 %93
    %v96 = vld [vmem:[%s4] sm:$0xff]
    %v97 = vld [vmem:[%s4 + $0x8] sm:$0xff]
    %v98 = vld [vmem:[%s4 + $0x10] sm:$0xff]
    %v99 = vld [vmem:[%s4 + $0x18] sm:$0xff]
    %101 = vset.pattern.permute.xlu0 0
    %102 = vperm.xlu0 %101, %v96
    %v103 = vpop.permute.xlu0 %102
    %106 = vset.pattern.permute.xlu0 0
    %107 = vperm.xlu0 %106, %v97
    %v108 = vpop.permute.xlu0 %107
    %111 = vset.pattern.permute.xlu0 0
    %112 = vperm.xlu0 %111, %v98
    %v113 = vpop.permute.xlu0 %112
    %116 = vset.pattern.permute.xlu0 0
    %117 = vperm.xlu0 %116, %v99
    %v118 = vpop.permute.xlu0 %117
    %v120 = vld [vmem:[#allocation2] sm:$0x1]
    %122 = vset.pattern.permute.xlu0 0
    %123 = vperm.xlu0 %122, %v120
    %v124 = vpop.permute.xlu0 %123
    %v126 = vlaneseq
    %v127 = vshrl.u32 %v126, 7
    %v128 = vsub.s32 0, %v127
    %v129 = vrot.slane %v124, %v128
    %v130 = vlaneseq
    %v131 = vand.u32 %v130, 127
    %vm132 = vcmp.ge.s32.totalorder %v131, 0
    %vm133 = vcmp.lt.s32.totalorder %v131, 64
    %vm134 = vmand %vm132, %vm133
    %v135 = vsel %vm134, 1, 0
    %v136 = vcvt.s32.f32 %v135
    %vm137 = vcmp.ge.s32.totalorder %v131, 64
    %vm138 = vcmp.lt.s32.totalorder %v131, 128
    %vm139 = vmand %vm137, %vm138
    %v140 = vsel %vm139, 1, 0
    %v141 = vcvt.s32.f32 %v140
    %v142 = vlaneseq
    %v143 = vshrl.u32 %v142, 7
    %v144 = vsub.s32 0, %v143
    %v145 = vrot.slane %v30, %v144
    %v146 = vmul.f32 %v39, %v145
    %v147 = vmul.f32 %v44, %v145
    %v148 = vmul.f32 %v49, %v145
    %v149 = vmul.f32 %v54, %v145
    %v150 = vadd.f32 %v79, %v146
    %v151 = vadd.f32 %v84, %v147
    %v152 = vadd.f32 %v89, %v148
    %v153 = vadd.f32 %v94, %v149
    %v154 = vlaneseq
    %v155 = vshrl.u32 %v154, 7
    %v156 = vsub.s32 0, %v155
    %v157 = vrot.slane %v31, %v156
    %v158 = vmul.f32 %v58, %v157
    %v159 = vmul.f32 %v62, %v157
    %v160 = vmul.f32 %v66, %v157
    %v161 = vmul.f32 %v70, %v157
    %v162 = vadd.f32 %v150, %v158
    %v163 = vadd.f32 %v151, %v159
    %v164 = vadd.f32 %v152, %v160
    %v165 = vadd.f32 %v153, %v161
    %v166 = vmax.f32 %v162, 0.0
    %v167 = vmax.f32 %v163, 0.0
    %v168 = vmax.f32 %v164, 0.0
    %v169 = vmax.f32 %v165, 0.0
    %v170 = vmul.f32 %v103, %v166
    %v171 = vmul.f32 %v108, %v167
    %v172 = vmul.f32 %v113, %v168
    %v173 = vmul.f32 %v118, %v169
    %v174 = vadd.f32 %v170, %v171
    %v175 = vadd.f32 %v174, %v172
    %v176 = vadd.f32 %v175, %v173
    %v177 = vrot.slane %v176, 4
    %v178 = vadd.f32 %v176, %v177
    %v179 = vrot.slane %v178, 2
    %v180 = vadd.f32 %v178, %v179
    %v181 = vrot.slane %v180, 1
    %v182 = vadd.f32 %v180, %v181
    %v183 = vadd.f32 %v182, %v129
    %184 = vst [vmem:[#allocation5] sm:$0x1] %v183
    %v185 = vsub.f32 %v183, %v29
    %v186 = vmul.f32 %v185, 0.00015625
    %v187 = vlaneseq
    %v188 = vshrl.u32 %v187, 7
    %v189 = vsub.s32 0, %v188
    %v190 = vrot.slane %v186, %v189
    %v191 = vmul.f32 %v166, %v190
    %v192 = vmul.f32 %v167, %v190
    %v193 = vmul.f32 %v168, %v190
    %v194 = vmul.f32 %v169, %v190
    %v195 = vmul.f32 %v191, %v136
    %v196 = vmul.f32 %v192, %v136
    %v197 = vmul.f32 %v193, %v136
    %v198 = vmul.f32 %v194, %v136
    %199 = vadd.xlane.f32.xlu0 %v195
    %v200 = vpop.xlane.xlu0 %199
    %201 = vadd.xlane.f32.xlu0 %v196
    %v202 = vpop.xlane.xlu0 %201
    %203 = vadd.xlane.f32.xlu0 %v197
    %v204 = vpop.xlane.xlu0 %203
    %205 = vadd.xlane.f32.xlu0 %v198
    %v206 = vpop.xlane.xlu0 %205
    %v207 = vmul.f32 %v200, %v136
    %v208 = vmul.f32 %v202, %v136
    %v209 = vmul.f32 %v204, %v136
    %v210 = vmul.f32 %v206, %v136
    %v211 = vadd.f32 %v207, 0.0
    %v212 = vadd.f32 %v208, 0.0
    %v213 = vadd.f32 %v209, 0.0
    %v214 = vadd.f32 %v210, 0.0
    %v215 = vmul.f32 %v191, %v141
    %v216 = vmul.f32 %v192, %v141
    %v217 = vmul.f32 %v193, %v141
    %v218 = vmul.f32 %v194, %v141
    %219 = vadd.xlane.f32.xlu0 %v215
    %v220 = vpop.xlane.xlu0 %219
    %221 = vadd.xlane.f32.xlu0 %v216
    %v222 = vpop.xlane.xlu0 %221
    %223 = vadd.xlane.f32.xlu0 %v217
    %v224 = vpop.xlane.xlu0 %223
    %225 = vadd.xlane.f32.xlu0 %v218
    %v226 = vpop.xlane.xlu0 %225
    %v227 = vmul.f32 %v220, %v141
    %v228 = vmul.f32 %v222, %v141
    %v229 = vmul.f32 %v224, %v141
    %v230 = vmul.f32 %v226, %v141
    %v231 = vadd.f32 %v211, %v227
    %v232 = vadd.f32 %v212, %v228
    %v233 = vadd.f32 %v213, %v229
    %v234 = vadd.f32 %v214, %v230
    %v235 = vmul.f32 %v186, %v136
    %vm236 = vcmask 1040384
    %v237 = vsel %vm236, %v235, 0.0
    %238 = vadd.xlane.f32.xlu0 %v237
    %v239 = vpop.xlane.xlu0 %238
    %v240 = vmul.f32 %v239, %v136
    %v241 = vadd.f32 %v240, 0.0
    %v242 = vmul.f32 %v186, %v141
    %v243 = vsel %vm236, %v242, 0.0
    %244 = vadd.xlane.f32.xlu0 %v243
    %v245 = vpop.xlane.xlu0 %244
    %v246 = vmul.f32 %v245, %v141
    %v247 = vadd.f32 %v241, %v246
    %v248 = vmul.f32 %v103, %v190
    %v249 = vmul.f32 %v108, %v190
    %v250 = vmul.f32 %v113, %v190
    %v251 = vmul.f32 %v118, %v190
    %vm252 = vcmp.gt.f32.partialorder %v162, 0.0
    %vm253 = vcmp.gt.f32.partialorder %v163, 0.0
    %vm254 = vcmp.gt.f32.partialorder %v164, 0.0
    %vm255 = vcmp.gt.f32.partialorder %v165, 0.0
    %v256 = vsel %vm252, %v248, 0.0
    %v257 = vsel %vm253, %v249, 0.0
    %v258 = vsel %vm254, %v250, 0.0
    %v259 = vsel %vm255, %v251, 0.0
    %v260 = vmul.f32 %v256, %v145
    %v261 = vmul.f32 %v257, %v145
    %v262 = vmul.f32 %v258, %v145
    %v263 = vmul.f32 %v259, %v145
    %v264 = vmul.f32 %v260, %v136
    %v265 = vmul.f32 %v261, %v136
    %v266 = vmul.f32 %v262, %v136
    %v267 = vmul.f32 %v263, %v136
    %268 = vadd.xlane.f32.xlu0 %v264
    %v269 = vpop.xlane.xlu0 %268
    %270 = vadd.xlane.f32.xlu0 %v265
    %v271 = vpop.xlane.xlu0 %270
    %272 = vadd.xlane.f32.xlu0 %v266
    %v273 = vpop.xlane.xlu0 %272
    %274 = vadd.xlane.f32.xlu0 %v267
    %v275 = vpop.xlane.xlu0 %274
    %v276 = vmul.f32 %v269, %v136
    %v277 = vmul.f32 %v271, %v136
    %v278 = vmul.f32 %v273, %v136
    %v279 = vmul.f32 %v275, %v136
    %v280 = vadd.f32 %v276, 0.0
    %v281 = vadd.f32 %v277, 0.0
    %v282 = vadd.f32 %v278, 0.0
    %v283 = vadd.f32 %v279, 0.0
    %v284 = vmul.f32 %v260, %v141
    %v285 = vmul.f32 %v261, %v141
    %v286 = vmul.f32 %v262, %v141
    %v287 = vmul.f32 %v263, %v141
    %288 = vadd.xlane.f32.xlu0 %v284
    %v289 = vpop.xlane.xlu0 %288
    %290 = vadd.xlane.f32.xlu0 %v285
    %v291 = vpop.xlane.xlu0 %290
    %292 = vadd.xlane.f32.xlu0 %v286
    %v293 = vpop.xlane.xlu0 %292
    %294 = vadd.xlane.f32.xlu0 %v287
    %v295 = vpop.xlane.xlu0 %294
    %v296 = vmul.f32 %v289, %v141
    %v297 = vmul.f32 %v291, %v141
    %v298 = vmul.f32 %v293, %v141
    %v299 = vmul.f32 %v295, %v141
    %v300 = vadd.f32 %v280, %v296
    %v301 = vadd.f32 %v281, %v297
    %v302 = vadd.f32 %v282, %v298
    %v303 = vadd.f32 %v283, %v299
    %v304 = vmul.f32 %v256, %v157
    %v305 = vmul.f32 %v257, %v157
    %v306 = vmul.f32 %v258, %v157
    %v307 = vmul.f32 %v259, %v157
    %v308 = vmul.f32 %v304, %v136
    %v309 = vmul.f32 %v305, %v136
    %v310 = vmul.f32 %v306, %v136
    %v311 = vmul.f32 %v307, %v136
    %312 = vadd.xlane.f32.xlu0 %v308
    %v313 = vpop.xlane.xlu0 %312
    %314 = vadd.xlane.f32.xlu0 %v309
    %v315 = vpop.xlane.xlu0 %314
    %316 = vadd.xlane.f32.xlu0 %v310
    %v317 = vpop.xlane.xlu0 %316
    %318 = vadd.xlane.f32.xlu0 %v311
    %v319 = vpop.xlane.xlu0 %318
    %v320 = vmul.f32 %v313, %v136
    %v321 = vmul.f32 %v315, %v136
    %v322 = vmul.f32 %v317, %v136
    %v323 = vmul.f32 %v319, %v136
    %v324 = vadd.f32 %v320, 0.0
    %v325 = vadd.f32 %v321, 0.0
    %v326 = vadd.f32 %v322, 0.0
    %v327 = vadd.f32 %v323, 0.0
    %v328 = vmul.f32 %v304, %v141
    %v329 = vmul.f32 %v305, %v141
    %v330 = vmul.f32 %v306, %v141
    %v331 = vmul.f32 %v307, %v141
    %332 = vadd.xlane.f32.xlu0 %v328
    %v333 = vpop.xlane.xlu0 %332
    %334 = vadd.xlane.f32.xlu0 %v329
    %v335 = vpop.xlane.xlu0 %334
    %336 = vadd.xlane.f32.xlu0 %v330
    %v337 = vpop.xlane.xlu0 %336
    %338 = vadd.xlane.f32.xlu0 %v331
    %v339 = vpop.xlane.xlu0 %338
    %v340 = vmul.f32 %v333, %v141
    %v341 = vmul.f32 %v335, %v141
    %v342 = vmul.f32 %v337, %v141
    %v343 = vmul.f32 %v339, %v141
    %v344 = vadd.f32 %v324, %v340
    %v345 = vadd.f32 %v325, %v341
    %v346 = vadd.f32 %v326, %v342
    %v347 = vadd.f32 %v327, %v343
    %v348 = vmul.f32 %v256, %v136
    %v349 = vmul.f32 %v257, %v136
    %v350 = vmul.f32 %v258, %v136
    %v351 = vmul.f32 %v259, %v136
    %352 = vadd.xlane.f32.xlu0 %v348
    %v353 = vpop.xlane.xlu0 %352
    %354 = vadd.xlane.f32.xlu0 %v349
    %v355 = vpop.xlane.xlu0 %354
    %356 = vadd.xlane.f32.xlu0 %v350
    %v357 = vpop.xlane.xlu0 %356
    %358 = vadd.xlane.f32.xlu0 %v351
    %v359 = vpop.xlane.xlu0 %358
    %v360 = vmul.f32 %v353, %v136
    %v361 = vmul.f32 %v355, %v136
    %v362 = vmul.f32 %v357, %v136
    %v363 = vmul.f32 %v359, %v136
    %v364 = vadd.f32 %v360, 0.0
    %v365 = vadd.f32 %v361, 0.0
    %v366 = vadd.f32 %v362, 0.0
    %v367 = vadd.f32 %v363, 0.0
    %v368 = vmul.f32 %v256, %v141
    %v369 = vmul.f32 %v257, %v141
    %v370 = vmul.f32 %v258, %v141
    %v371 = vmul.f32 %v259, %v141
    %372 = vadd.xlane.f32.xlu0 %v368
    %v373 = vpop.xlane.xlu0 %372
    %374 = vadd.xlane.f32.xlu0 %v369
    %v375 = vpop.xlane.xlu0 %374
    %376 = vadd.xlane.f32.xlu0 %v370
    %v377 = vpop.xlane.xlu0 %376
    %378 = vadd.xlane.f32.xlu0 %v371
    %v379 = vpop.xlane.xlu0 %378
    %v380 = vmul.f32 %v373, %v141
    %v381 = vmul.f32 %v375, %v141
    %v382 = vmul.f32 %v377, %v141
    %v383 = vmul.f32 %v379, %v141
    %v384 = vadd.f32 %v364, %v380
    %v385 = vadd.f32 %v365, %v381
    %v386 = vadd.f32 %v366, %v382
    %v387 = vadd.f32 %v367, %v383
    %v388 = vmul.f32 %v39, 0.99998
    %v389 = vmul.f32 %v44, 0.99998
    %v390 = vmul.f32 %v49, 0.99998
    %v391 = vmul.f32 %v54, 0.99998
    %v392 = vsub.f32 %v388, %v300
    %v393 = vsub.f32 %v389, %v301
    %v394 = vsub.f32 %v390, %v302
    %v395 = vsub.f32 %v391, %v303
    %v396 = vmul.f32 %v58, 0.99998
    %v397 = vmul.f32 %v62, 0.99998
    %v398 = vmul.f32 %v66, 0.99998
    %v399 = vmul.f32 %v70, 0.99998
    %v400 = vsub.f32 %v396, %v344
    %v401 = vsub.f32 %v397, %v345
    %v402 = vsub.f32 %v398, %v346
    %v403 = vsub.f32 %v399, %v347
    %v404 = vmul.f32 %v79, 0.99998
    %v405 = vmul.f32 %v84, 0.99998
    %v406 = vmul.f32 %v89, 0.99998
    %v407 = vmul.f32 %v94, 0.99998
    %v408 = vsub.f32 %v404, %v384
    %v409 = vsub.f32 %v405, %v385
    %v410 = vsub.f32 %v406, %v386
    %v411 = vsub.f32 %v407, %v387
    %v412 = vmul.f32 %v103, 0.99998
    %v413 = vmul.f32 %v108, 0.99998
    %v414 = vmul.f32 %v113, 0.99998
    %v415 = vmul.f32 %v118, 0.99998
    %v416 = vsub.f32 %v412, %v231
    %v417 = vsub.f32 %v413, %v232
    %v418 = vsub.f32 %v414, %v233
    %v419 = vsub.f32 %v415, %v234
    %v420 = vmul.f32 %v129, 0.99998
    %v421 = vsub.f32 %v420, %v247
    %v422 = vmul.f32 %v392, %v145
    %v423 = vmul.f32 %v393, %v145
    %v424 = vmul.f32 %v394, %v145
    %v425 = vmul.f32 %v395, %v145
    %v426 = vadd.f32 %v408, %v422
    %v427 = vadd.f32 %v409, %v423
    %v428 = vadd.f32 %v410, %v424
    %v429 = vadd.f32 %v411, %v425
    %v430 = vmul.f32 %v400, %v157
    %v431 = vmul.f32 %v401, %v157
    %v432 = vmul.f32 %v402, %v157
    %v433 = vmul.f32 %v403, %v157
    %v434 = vadd.f32 %v426, %v430
    %v435 = vadd.f32 %v427, %v431
    %v436 = vadd.f32 %v428, %v432
    %v437 = vadd.f32 %v429, %v433
    %v438 = vmax.f32 %v434, 0.0
    %v439 = vmax.f32 %v435, 0.0
    %v440 = vmax.f32 %v436, 0.0
    %v441 = vmax.f32 %v437, 0.0
    %v442 = vmul.f32 %v416, %v438
    %v443 = vmul.f32 %v417, %v439
    %v444 = vmul.f32 %v418, %v440
    %v445 = vmul.f32 %v419, %v441
    %v446 = vadd.f32 %v442, %v443
    %v447 = vadd.f32 %v446, %v444
    %v448 = vadd.f32 %v447, %v445
    %v449 = vrot.slane %v448, 4
    %v450 = vadd.f32 %v448, %v449
    %v451 = vrot.slane %v450, 2
    %v452 = vadd.f32 %v450, %v451
    %v453 = vrot.slane %v452, 1
    %v454 = vadd.f32 %v452, %v453
    %v455 = vadd.f32 %v454, %v421
    %s456 = scalar_lea.vmem [#allocation5], 1
    %457 = vst [vmem:[%s456] sm:$0x1] %v455
    %v458 = vsub.f32 %v455, %v29
    %v459 = vmul.f32 %v458, 0.00015625
    %v460 = vlaneseq
    %v461 = vshrl.u32 %v460, 7
    %v462 = vsub.s32 0, %v461
    %v463 = vrot.slane %v459, %v462
    %v464 = vmul.f32 %v438, %v463
    %v465 = vmul.f32 %v439, %v463
    %v466 = vmul.f32 %v440, %v463
    %v467 = vmul.f32 %v441, %v463
    %v468 = vmul.f32 %v464, %v136
    %v469 = vmul.f32 %v465, %v136
    %v470 = vmul.f32 %v466, %v136
    %v471 = vmul.f32 %v467, %v136
    %472 = vadd.xlane.f32.xlu0 %v468
    %v473 = vpop.xlane.xlu0 %472
    %474 = vadd.xlane.f32.xlu0 %v469
    %v475 = vpop.xlane.xlu0 %474
    %476 = vadd.xlane.f32.xlu0 %v470
    %v477 = vpop.xlane.xlu0 %476
    %478 = vadd.xlane.f32.xlu0 %v471
    %v479 = vpop.xlane.xlu0 %478
    %v480 = vmul.f32 %v473, %v136
    %v481 = vmul.f32 %v475, %v136
    %v482 = vmul.f32 %v477, %v136
    %v483 = vmul.f32 %v479, %v136
    %v484 = vadd.f32 %v480, 0.0
    %v485 = vadd.f32 %v481, 0.0
    %v486 = vadd.f32 %v482, 0.0
    %v487 = vadd.f32 %v483, 0.0
    %v488 = vmul.f32 %v464, %v141
    %v489 = vmul.f32 %v465, %v141
    %v490 = vmul.f32 %v466, %v141
    %v491 = vmul.f32 %v467, %v141
    %492 = vadd.xlane.f32.xlu0 %v488
    %v493 = vpop.xlane.xlu0 %492
    %494 = vadd.xlane.f32.xlu0 %v489
    %v495 = vpop.xlane.xlu0 %494
    %496 = vadd.xlane.f32.xlu0 %v490
    %v497 = vpop.xlane.xlu0 %496
    %498 = vadd.xlane.f32.xlu0 %v491
    %v499 = vpop.xlane.xlu0 %498
    %v500 = vmul.f32 %v493, %v141
    %v501 = vmul.f32 %v495, %v141
    %v502 = vmul.f32 %v497, %v141
    %v503 = vmul.f32 %v499, %v141
    %v504 = vadd.f32 %v484, %v500
    %v505 = vadd.f32 %v485, %v501
    %v506 = vadd.f32 %v486, %v502
    %v507 = vadd.f32 %v487, %v503
    %v508 = vmul.f32 %v459, %v136
    %v509 = vsel %vm236, %v508, 0.0
    %510 = vadd.xlane.f32.xlu0 %v509
    %v511 = vpop.xlane.xlu0 %510
    %v512 = vmul.f32 %v511, %v136
    %v513 = vadd.f32 %v512, 0.0
    %v514 = vmul.f32 %v459, %v141
    %v515 = vsel %vm236, %v514, 0.0
    %516 = vadd.xlane.f32.xlu0 %v515
    %v517 = vpop.xlane.xlu0 %516
    %v518 = vmul.f32 %v517, %v141
    %v519 = vadd.f32 %v513, %v518
    %v520 = vmul.f32 %v416, %v463
    %v521 = vmul.f32 %v417, %v463
    %v522 = vmul.f32 %v418, %v463
    %v523 = vmul.f32 %v419, %v463
    %vm524 = vcmp.gt.f32.partialorder %v434, 0.0
    %vm525 = vcmp.gt.f32.partialorder %v435, 0.0
    %vm526 = vcmp.gt.f32.partialorder %v436, 0.0
    %vm527 = vcmp.gt.f32.partialorder %v437, 0.0
    %v528 = vsel %vm524, %v520, 0.0
    %v529 = vsel %vm525, %v521, 0.0
    %v530 = vsel %vm526, %v522, 0.0
    %v531 = vsel %vm527, %v523, 0.0
    %v532 = vmul.f32 %v528, %v145
    %v533 = vmul.f32 %v529, %v145
    %v534 = vmul.f32 %v530, %v145
    %v535 = vmul.f32 %v531, %v145
    %v536 = vmul.f32 %v532, %v136
    %v537 = vmul.f32 %v533, %v136
    %v538 = vmul.f32 %v534, %v136
    %v539 = vmul.f32 %v535, %v136
    %540 = vadd.xlane.f32.xlu0 %v536
    %v541 = vpop.xlane.xlu0 %540
    %542 = vadd.xlane.f32.xlu0 %v537
    %v543 = vpop.xlane.xlu0 %542
    %544 = vadd.xlane.f32.xlu0 %v538
    %v545 = vpop.xlane.xlu0 %544
    %546 = vadd.xlane.f32.xlu0 %v539
    %v547 = vpop.xlane.xlu0 %546
    %v548 = vmul.f32 %v541, %v136
    %v549 = vmul.f32 %v543, %v136
    %v550 = vmul.f32 %v545, %v136
    %v551 = vmul.f32 %v547, %v136
    %v552 = vadd.f32 %v548, 0.0
    %v553 = vadd.f32 %v549, 0.0
    %v554 = vadd.f32 %v550, 0.0
    %v555 = vadd.f32 %v551, 0.0
    %v556 = vmul.f32 %v532, %v141
    %v557 = vmul.f32 %v533, %v141
    %v558 = vmul.f32 %v534, %v141
    %v559 = vmul.f32 %v535, %v141
    %560 = vadd.xlane.f32.xlu0 %v556
    %v561 = vpop.xlane.xlu0 %560
    %562 = vadd.xlane.f32.xlu0 %v557
    %v563 = vpop.xlane.xlu0 %562
    %564 = vadd.xlane.f32.xlu0 %v558
    %v565 = vpop.xlane.xlu0 %564
    %566 = vadd.xlane.f32.xlu0 %v559
    %v567 = vpop.xlane.xlu0 %566
    %v568 = vmul.f32 %v561, %v141
    %v569 = vmul.f32 %v563, %v141
    %v570 = vmul.f32 %v565, %v141
    %v571 = vmul.f32 %v567, %v141
    %v572 = vadd.f32 %v552, %v568
    %v573 = vadd.f32 %v553, %v569
    %v574 = vadd.f32 %v554, %v570
    %v575 = vadd.f32 %v555, %v571
    %v576 = vmul.f32 %v528, %v157
    %v577 = vmul.f32 %v529, %v157
    %v578 = vmul.f32 %v530, %v157
    %v579 = vmul.f32 %v531, %v157
    %v580 = vmul.f32 %v576, %v136
    %v581 = vmul.f32 %v577, %v136
    %v582 = vmul.f32 %v578, %v136
    %v583 = vmul.f32 %v579, %v136
    %584 = vadd.xlane.f32.xlu0 %v580
    %v585 = vpop.xlane.xlu0 %584
    %586 = vadd.xlane.f32.xlu0 %v581
    %v587 = vpop.xlane.xlu0 %586
    %588 = vadd.xlane.f32.xlu0 %v582
    %v589 = vpop.xlane.xlu0 %588
    %590 = vadd.xlane.f32.xlu0 %v583
    %v591 = vpop.xlane.xlu0 %590
    %v592 = vmul.f32 %v585, %v136
    %v593 = vmul.f32 %v587, %v136
    %v594 = vmul.f32 %v589, %v136
    %v595 = vmul.f32 %v591, %v136
    %v596 = vadd.f32 %v592, 0.0
    %v597 = vadd.f32 %v593, 0.0
    %v598 = vadd.f32 %v594, 0.0
    %v599 = vadd.f32 %v595, 0.0
    %v600 = vmul.f32 %v576, %v141
    %v601 = vmul.f32 %v577, %v141
    %v602 = vmul.f32 %v578, %v141
    %v603 = vmul.f32 %v579, %v141
    %604 = vadd.xlane.f32.xlu0 %v600
    %v605 = vpop.xlane.xlu0 %604
    %606 = vadd.xlane.f32.xlu0 %v601
    %v607 = vpop.xlane.xlu0 %606
    %608 = vadd.xlane.f32.xlu0 %v602
    %v609 = vpop.xlane.xlu0 %608
    %610 = vadd.xlane.f32.xlu0 %v603
    %v611 = vpop.xlane.xlu0 %610
    %v612 = vmul.f32 %v605, %v141
    %v613 = vmul.f32 %v607, %v141
    %v614 = vmul.f32 %v609, %v141
    %v615 = vmul.f32 %v611, %v141
    %v616 = vadd.f32 %v596, %v612
    %v617 = vadd.f32 %v597, %v613
    %v618 = vadd.f32 %v598, %v614
    %v619 = vadd.f32 %v599, %v615
    %v620 = vmul.f32 %v528, %v136
    %v621 = vmul.f32 %v529, %v136
    %v622 = vmul.f32 %v530, %v136
    %v623 = vmul.f32 %v531, %v136
    %624 = vadd.xlane.f32.xlu0 %v620
    %v625 = vpop.xlane.xlu0 %624
    %626 = vadd.xlane.f32.xlu0 %v621
    %v627 = vpop.xlane.xlu0 %626
    %628 = vadd.xlane.f32.xlu0 %v622
    %v629 = vpop.xlane.xlu0 %628
    %630 = vadd.xlane.f32.xlu0 %v623
    %v631 = vpop.xlane.xlu0 %630
    %v632 = vmul.f32 %v625, %v136
    %v633 = vmul.f32 %v627, %v136
    %v634 = vmul.f32 %v629, %v136
    %v635 = vmul.f32 %v631, %v136
    %v636 = vadd.f32 %v632, 0.0
    %v637 = vadd.f32 %v633, 0.0
    %v638 = vadd.f32 %v634, 0.0
    %v639 = vadd.f32 %v635, 0.0
    %v640 = vmul.f32 %v528, %v141
    %v641 = vmul.f32 %v529, %v141
    %v642 = vmul.f32 %v530, %v141
    %v643 = vmul.f32 %v531, %v141
    %644 = vadd.xlane.f32.xlu0 %v640
    %v645 = vpop.xlane.xlu0 %644
    %646 = vadd.xlane.f32.xlu0 %v641
    %v647 = vpop.xlane.xlu0 %646
    %648 = vadd.xlane.f32.xlu0 %v642
    %v649 = vpop.xlane.xlu0 %648
    %650 = vadd.xlane.f32.xlu0 %v643
    %v651 = vpop.xlane.xlu0 %650
    %v652 = vmul.f32 %v645, %v141
    %v653 = vmul.f32 %v647, %v141
    %v654 = vmul.f32 %v649, %v141
    %v655 = vmul.f32 %v651, %v141
    %v656 = vadd.f32 %v636, %v652
    %v657 = vadd.f32 %v637, %v653
    %v658 = vadd.f32 %v638, %v654
    %v659 = vadd.f32 %v639, %v655
    %v660 = vmul.f32 %v392, 0.99999
    %v661 = vmul.f32 %v393, 0.99999
    %v662 = vmul.f32 %v394, 0.99999
    %v663 = vmul.f32 %v395, 0.99999
    %v664 = vsub.f32 %v660, %v572
    %v665 = vsub.f32 %v661, %v573
    %v666 = vsub.f32 %v662, %v574
    %v667 = vsub.f32 %v663, %v575
    %v668 = vmul.f32 %v400, 0.99999
    %v669 = vmul.f32 %v401, 0.99999
    %v670 = vmul.f32 %v402, 0.99999
    %v671 = vmul.f32 %v403, 0.99999
    %v672 = vsub.f32 %v668, %v616
    %v673 = vsub.f32 %v669, %v617
    %v674 = vsub.f32 %v670, %v618
    %v675 = vsub.f32 %v671, %v619
    %v676 = vmul.f32 %v408, 0.99999
    %v677 = vmul.f32 %v409, 0.99999
    %v678 = vmul.f32 %v410, 0.99999
    %v679 = vmul.f32 %v411, 0.99999
    %v680 = vsub.f32 %v676, %v656
    %v681 = vsub.f32 %v677, %v657
    %v682 = vsub.f32 %v678, %v658
    %v683 = vsub.f32 %v679, %v659
    %v684 = vmul.f32 %v416, 0.99999
    %v685 = vmul.f32 %v417, 0.99999
    %v686 = vmul.f32 %v418, 0.99999
    %v687 = vmul.f32 %v419, 0.99999
    %v688 = vsub.f32 %v684, %v504
    %v689 = vsub.f32 %v685, %v505
    %v690 = vsub.f32 %v686, %v506
    %v691 = vsub.f32 %v687, %v507
    %v692 = vmul.f32 %v421, 0.99999
    %v693 = vsub.f32 %v692, %v519
    %v694 = vmul.f32 %v664, %v145
    %v695 = vmul.f32 %v665, %v145
    %v696 = vmul.f32 %v666, %v145
    %v697 = vmul.f32 %v667, %v145
    %v698 = vadd.f32 %v680, %v694
    %v699 = vadd.f32 %v681, %v695
    %v700 = vadd.f32 %v682, %v696
    %v701 = vadd.f32 %v683, %v697
    %v702 = vmul.f32 %v672, %v157
    %v703 = vmul.f32 %v673, %v157
    %v704 = vmul.f32 %v674, %v157
    %v705 = vmul.f32 %v675, %v157
    %v706 = vadd.f32 %v698, %v702
    %v707 = vadd.f32 %v699, %v703
    %v708 = vadd.f32 %v700, %v704
    %v709 = vadd.f32 %v701, %v705
    %v710 = vmax.f32 %v706, 0.0
    %v711 = vmax.f32 %v707, 0.0
    %v712 = vmax.f32 %v708, 0.0
    %v713 = vmax.f32 %v709, 0.0
    %v714 = vmul.f32 %v688, %v710
    %v715 = vmul.f32 %v689, %v711
    %v716 = vmul.f32 %v690, %v712
    %v717 = vmul.f32 %v691, %v713
    %v718 = vadd.f32 %v714, %v715
    %v719 = vadd.f32 %v718, %v716
    %v720 = vadd.f32 %v719, %v717
    %v721 = vrot.slane %v720, 4
    %v722 = vadd.f32 %v720, %v721
    %v723 = vrot.slane %v722, 2
    %v724 = vadd.f32 %v722, %v723
    %v725 = vrot.slane %v724, 1
    %v726 = vadd.f32 %v724, %v725
    %v727 = vadd.f32 %v726, %v693
    %s728 = scalar_lea.vmem [#allocation5], 2
    %729 = vst [vmem:[%s728] sm:$0x1] %v727
    %v730 = vsub.f32 %v727, %v29
    %v731 = vmul.f32 %v730, 0.00015625
    %v732 = vlaneseq
    %v733 = vshrl.u32 %v732, 7
    %v734 = vsub.s32 0, %v733
    %v735 = vrot.slane %v731, %v734
    %v736 = vmul.f32 %v710, %v735
    %v737 = vmul.f32 %v711, %v735
    %v738 = vmul.f32 %v712, %v735
    %v739 = vmul.f32 %v713, %v735
    %v740 = vmul.f32 %v736, %v136
    %v741 = vmul.f32 %v737, %v136
    %v742 = vmul.f32 %v738, %v136
    %v743 = vmul.f32 %v739, %v136
    %744 = vadd.xlane.f32.xlu0 %v740
    %v745 = vpop.xlane.xlu0 %744
    %746 = vadd.xlane.f32.xlu0 %v741
    %v747 = vpop.xlane.xlu0 %746
    %748 = vadd.xlane.f32.xlu0 %v742
    %v749 = vpop.xlane.xlu0 %748
    %750 = vadd.xlane.f32.xlu0 %v743
    %v751 = vpop.xlane.xlu0 %750
    %v752 = vmul.f32 %v745, %v136
    %v753 = vmul.f32 %v747, %v136
    %v754 = vmul.f32 %v749, %v136
    %v755 = vmul.f32 %v751, %v136
    %v756 = vadd.f32 %v752, 0.0
    %v757 = vadd.f32 %v753, 0.0
    %v758 = vadd.f32 %v754, 0.0
    %v759 = vadd.f32 %v755, 0.0
    %v760 = vmul.f32 %v736, %v141
    %v761 = vmul.f32 %v737, %v141
    %v762 = vmul.f32 %v738, %v141
    %v763 = vmul.f32 %v739, %v141
    %764 = vadd.xlane.f32.xlu0 %v760
    %v765 = vpop.xlane.xlu0 %764
    %766 = vadd.xlane.f32.xlu0 %v761
    %v767 = vpop.xlane.xlu0 %766
    %768 = vadd.xlane.f32.xlu0 %v762
    %v769 = vpop.xlane.xlu0 %768
    %770 = vadd.xlane.f32.xlu0 %v763
    %v771 = vpop.xlane.xlu0 %770
    %v772 = vmul.f32 %v765, %v141
    %v773 = vmul.f32 %v767, %v141
    %v774 = vmul.f32 %v769, %v141
    %v775 = vmul.f32 %v771, %v141
    %v776 = vadd.f32 %v756, %v772
    %v777 = vadd.f32 %v757, %v773
    %v778 = vadd.f32 %v758, %v774
    %v779 = vadd.f32 %v759, %v775
    %v780 = vmul.f32 %v731, %v136
    %v781 = vsel %vm236, %v780, 0.0
    %782 = vadd.xlane.f32.xlu0 %v781
    %v783 = vpop.xlane.xlu0 %782
    %v784 = vmul.f32 %v783, %v136
    %v785 = vadd.f32 %v784, 0.0
    %v786 = vmul.f32 %v731, %v141
    %v787 = vsel %vm236, %v786, 0.0
    %788 = vadd.xlane.f32.xlu0 %v787
    %v789 = vpop.xlane.xlu0 %788
    %v790 = vmul.f32 %v789, %v141
    %v791 = vadd.f32 %v785, %v790
    %v792 = vmul.f32 %v688, %v735
    %v793 = vmul.f32 %v689, %v735
    %v794 = vmul.f32 %v690, %v735
    %v795 = vmul.f32 %v691, %v735
    %vm796 = vcmp.gt.f32.partialorder %v706, 0.0
    %vm797 = vcmp.gt.f32.partialorder %v707, 0.0
    %vm798 = vcmp.gt.f32.partialorder %v708, 0.0
    %vm799 = vcmp.gt.f32.partialorder %v709, 0.0
    %v800 = vsel %vm796, %v792, 0.0
    %v801 = vsel %vm797, %v793, 0.0
    %v802 = vsel %vm798, %v794, 0.0
    %v803 = vsel %vm799, %v795, 0.0
    %v804 = vmul.f32 %v800, %v145
    %v805 = vmul.f32 %v801, %v145
    %v806 = vmul.f32 %v802, %v145
    %v807 = vmul.f32 %v803, %v145
    %v808 = vmul.f32 %v804, %v136
    %v809 = vmul.f32 %v805, %v136
    %v810 = vmul.f32 %v806, %v136
    %v811 = vmul.f32 %v807, %v136
    %812 = vadd.xlane.f32.xlu0 %v808
    %v813 = vpop.xlane.xlu0 %812
    %814 = vadd.xlane.f32.xlu0 %v809
    %v815 = vpop.xlane.xlu0 %814
    %816 = vadd.xlane.f32.xlu0 %v810
    %v817 = vpop.xlane.xlu0 %816
    %818 = vadd.xlane.f32.xlu0 %v811
    %v819 = vpop.xlane.xlu0 %818
    %v820 = vmul.f32 %v813, %v136
    %v821 = vmul.f32 %v815, %v136
    %v822 = vmul.f32 %v817, %v136
    %v823 = vmul.f32 %v819, %v136
    %v824 = vadd.f32 %v820, 0.0
    %v825 = vadd.f32 %v821, 0.0
    %v826 = vadd.f32 %v822, 0.0
    %v827 = vadd.f32 %v823, 0.0
    %v828 = vmul.f32 %v804, %v141
    %v829 = vmul.f32 %v805, %v141
    %v830 = vmul.f32 %v806, %v141
    %v831 = vmul.f32 %v807, %v141
    %832 = vadd.xlane.f32.xlu0 %v828
    %v833 = vpop.xlane.xlu0 %832
    %834 = vadd.xlane.f32.xlu0 %v829
    %v835 = vpop.xlane.xlu0 %834
    %836 = vadd.xlane.f32.xlu0 %v830
    %v837 = vpop.xlane.xlu0 %836
    %838 = vadd.xlane.f32.xlu0 %v831
    %v839 = vpop.xlane.xlu0 %838
    %v840 = vmul.f32 %v833, %v141
    %v841 = vmul.f32 %v835, %v141
    %v842 = vmul.f32 %v837, %v141
    %v843 = vmul.f32 %v839, %v141
    %v844 = vadd.f32 %v824, %v840
    %v845 = vadd.f32 %v825, %v841
    %v846 = vadd.f32 %v826, %v842
    %v847 = vadd.f32 %v827, %v843
    %v848 = vmul.f32 %v800, %v157
    %v849 = vmul.f32 %v801, %v157
    %v850 = vmul.f32 %v802, %v157
    %v851 = vmul.f32 %v803, %v157
    %v852 = vmul.f32 %v848, %v136
    %v853 = vmul.f32 %v849, %v136
    %v854 = vmul.f32 %v850, %v136
    %v855 = vmul.f32 %v851, %v136
    %856 = vadd.xlane.f32.xlu0 %v852
    %v857 = vpop.xlane.xlu0 %856
    %858 = vadd.xlane.f32.xlu0 %v853
    %v859 = vpop.xlane.xlu0 %858
    %860 = vadd.xlane.f32.xlu0 %v854
    %v861 = vpop.xlane.xlu0 %860
    %862 = vadd.xlane.f32.xlu0 %v855
    %v863 = vpop.xlane.xlu0 %862
    %v864 = vmul.f32 %v857, %v136
    %v865 = vmul.f32 %v859, %v136
    %v866 = vmul.f32 %v861, %v136
    %v867 = vmul.f32 %v863, %v136
    %v868 = vadd.f32 %v864, 0.0
    %v869 = vadd.f32 %v865, 0.0
    %v870 = vadd.f32 %v866, 0.0
    %v871 = vadd.f32 %v867, 0.0
    %v872 = vmul.f32 %v848, %v141
    %v873 = vmul.f32 %v849, %v141
    %v874 = vmul.f32 %v850, %v141
    %v875 = vmul.f32 %v851, %v141
    %876 = vadd.xlane.f32.xlu0 %v872
    %v877 = vpop.xlane.xlu0 %876
    %878 = vadd.xlane.f32.xlu0 %v873
    %v879 = vpop.xlane.xlu0 %878
    %880 = vadd.xlane.f32.xlu0 %v874
    %v881 = vpop.xlane.xlu0 %880
    %882 = vadd.xlane.f32.xlu0 %v875
    %v883 = vpop.xlane.xlu0 %882
    %v884 = vmul.f32 %v877, %v141
    %v885 = vmul.f32 %v879, %v141
    %v886 = vmul.f32 %v881, %v141
    %v887 = vmul.f32 %v883, %v141
    %v888 = vadd.f32 %v868, %v884
    %v889 = vadd.f32 %v869, %v885
    %v890 = vadd.f32 %v870, %v886
    %v891 = vadd.f32 %v871, %v887
    %v892 = vmul.f32 %v800, %v136
    %v893 = vmul.f32 %v801, %v136
    %v894 = vmul.f32 %v802, %v136
    %v895 = vmul.f32 %v803, %v136
    %896 = vadd.xlane.f32.xlu0 %v892
    %v897 = vpop.xlane.xlu0 %896
    %898 = vadd.xlane.f32.xlu0 %v893
    %v899 = vpop.xlane.xlu0 %898
    %900 = vadd.xlane.f32.xlu0 %v894
    %v901 = vpop.xlane.xlu0 %900
    %902 = vadd.xlane.f32.xlu0 %v895
    %v903 = vpop.xlane.xlu0 %902
    %v904 = vmul.f32 %v897, %v136
    %v905 = vmul.f32 %v899, %v136
    %v906 = vmul.f32 %v901, %v136
    %v907 = vmul.f32 %v903, %v136
    %v908 = vadd.f32 %v904, 0.0
    %v909 = vadd.f32 %v905, 0.0
    %v910 = vadd.f32 %v906, 0.0
    %v911 = vadd.f32 %v907, 0.0
    %v912 = vmul.f32 %v800, %v141
    %v913 = vmul.f32 %v801, %v141
    %v914 = vmul.f32 %v802, %v141
    %v915 = vmul.f32 %v803, %v141
    %916 = vadd.xlane.f32.xlu0 %v912
    %v917 = vpop.xlane.xlu0 %916
    %918 = vadd.xlane.f32.xlu0 %v913
    %v919 = vpop.xlane.xlu0 %918
    %920 = vadd.xlane.f32.xlu0 %v914
    %v921 = vpop.xlane.xlu0 %920
    %922 = vadd.xlane.f32.xlu0 %v915
    %v923 = vpop.xlane.xlu0 %922
    %v924 = vmul.f32 %v917, %v141
    %v925 = vmul.f32 %v919, %v141
    %v926 = vmul.f32 %v921, %v141
    %v927 = vmul.f32 %v923, %v141
    %v928 = vadd.f32 %v908, %v924
    %v929 = vadd.f32 %v909, %v925
    %v930 = vadd.f32 %v910, %v926
    %v931 = vadd.f32 %v911, %v927
    %v932 = vmul.f32 %v664, 0.9999933
    %v933 = vmul.f32 %v665, 0.9999933
    %v934 = vmul.f32 %v666, 0.9999933
    %v935 = vmul.f32 %v667, 0.9999933
    %v936 = vsub.f32 %v932, %v844
    %v937 = vsub.f32 %v933, %v845
    %v938 = vsub.f32 %v934, %v846
    %v939 = vsub.f32 %v935, %v847
    %v940 = vmul.f32 %v672, 0.9999933
    %v941 = vmul.f32 %v673, 0.9999933
    %v942 = vmul.f32 %v674, 0.9999933
    %v943 = vmul.f32 %v675, 0.9999933
    %v944 = vsub.f32 %v940, %v888
    %v945 = vsub.f32 %v941, %v889
    %v946 = vsub.f32 %v942, %v890
    %v947 = vsub.f32 %v943, %v891
    %v948 = vmul.f32 %v680, 0.9999933
    %v949 = vmul.f32 %v681, 0.9999933
    %v950 = vmul.f32 %v682, 0.9999933
    %v951 = vmul.f32 %v683, 0.9999933
    %v952 = vsub.f32 %v948, %v928
    %v953 = vsub.f32 %v949, %v929
    %v954 = vsub.f32 %v950, %v930
    %v955 = vsub.f32 %v951, %v931
    %v956 = vmul.f32 %v688, 0.9999933
    %v957 = vmul.f32 %v689, 0.9999933
    %v958 = vmul.f32 %v690, 0.9999933
    %v959 = vmul.f32 %v691, 0.9999933
    %v960 = vsub.f32 %v956, %v776
    %v961 = vsub.f32 %v957, %v777
    %v962 = vsub.f32 %v958, %v778
    %v963 = vsub.f32 %v959, %v779
    %v964 = vmul.f32 %v693, 0.9999933
    %v965 = vsub.f32 %v964, %v791
    %v966 = vmul.f32 %v936, %v145
    %v967 = vmul.f32 %v937, %v145
    %v968 = vmul.f32 %v938, %v145
    %v969 = vmul.f32 %v939, %v145
    %v970 = vadd.f32 %v952, %v966
    %v971 = vadd.f32 %v953, %v967
    %v972 = vadd.f32 %v954, %v968
    %v973 = vadd.f32 %v955, %v969
    %v974 = vmul.f32 %v944, %v157
    %v975 = vmul.f32 %v945, %v157
    %v976 = vmul.f32 %v946, %v157
    %v977 = vmul.f32 %v947, %v157
    %v978 = vadd.f32 %v970, %v974
    %v979 = vadd.f32 %v971, %v975
    %v980 = vadd.f32 %v972, %v976
    %v981 = vadd.f32 %v973, %v977
    %v982 = vmax.f32 %v978, 0.0
    %v983 = vmax.f32 %v979, 0.0
    %v984 = vmax.f32 %v980, 0.0
    %v985 = vmax.f32 %v981, 0.0
    %v986 = vmul.f32 %v960, %v982
    %v987 = vmul.f32 %v961, %v983
    %v988 = vmul.f32 %v962, %v984
    %v989 = vmul.f32 %v963, %v985
    %v990 = vadd.f32 %v986, %v987
    %v991 = vadd.f32 %v990, %v988
    %v992 = vadd.f32 %v991, %v989
    %v993 = vrot.slane %v992, 4
    %v994 = vadd.f32 %v992, %v993
    %v995 = vrot.slane %v994, 2
    %v996 = vadd.f32 %v994, %v995
    %v997 = vrot.slane %v996, 1
    %v998 = vadd.f32 %v996, %v997
    %v999 = vadd.f32 %v998, %v965
    %1000 = vst [vmem:[#allocation3] sm:$0x1] %v999
    // Predicated region
    $region26: #{tpu_custom_call.1} parent=1 // pred_check
      _
    $region27: #{tpu_custom_call.1} parent=1 // pred_check_branch
      %1002 = sbr.rel (0) target = $region29
    $region28: #{tpu_custom_call.1} parent=1 // pred_region
      %s1004 = ssub.s32 16, 16
      %1005 = vsyncadd [#allocation4], %s1004
      %s1007 = sshll.u32 [#allocation3], 4
      %s1008 = int_to_ptr.vmem [resolvable:$true] %s1007
      %1010 = dma.vmem_to_hbm [thread:$0]  %s1008, 16, %s6, [#allocation4]
    $region29: #{tpu_custom_call.1} parent=1 // pred_fallthru
      _
    // Predicated region
    $region30: #{tpu_custom_call.1} parent=1 // pred_check
      _
    $region31: #{tpu_custom_call.1} parent=1 // pred_check_branch
      %1012 = sbr.rel (0) target = $region33
    $region32: #{tpu_custom_call.1} parent=1 // pred_region
      %s1014 = ssub.s32 48, 48
      %1015 = vsyncadd [#allocation6], %s1014
      %s1016 = sshll.u32 [#allocation5], 4
      %s1017 = int_to_ptr.vmem [resolvable:$true] %s1016
      %1022 = dma.vmem_to_hbm [thread:$0]  %s1017, 48, %s7, [#allocation6], 16, 16, 1
    $region33: #{tpu_custom_call.1} parent=1 // pred_fallthru
      _
    // Predicated region
    $region34: #{tpu_custom_call.1} parent=1 // pred_check
      _
    $region35: #{tpu_custom_call.1} parent=1 // pred_check_branch
      %1024 = sbr.rel (0) target = $region37
    $region36: #{tpu_custom_call.1} parent=1 // pred_region
      %1025 = dma.done [#allocation4], 16
    $region37: #{tpu_custom_call.1} parent=1 // pred_fallthru
      _
    // Predicated region
    $region38: #{tpu_custom_call.1} parent=1 // pred_check
      _
    $region39: #{tpu_custom_call.1} parent=1 // pred_check_branch
      %1027 = sbr.rel (0) target = $region41
    $region40: #{tpu_custom_call.1} parent=1 // pred_region
      %1028 = dma.done [#allocation6], 48
    $region41: #{tpu_custom_call.1} parent=1 // pred_fallthru
      _
    %1029 = vsyncpa [#allocation4], 1
    %1030 = vsyncpa [#allocation6], 1

</llo_original>
